<compile_context>
chip_gen: v5e
topology: v5e:2x2
jax: 0.10.0
libtpu: 0.0.40
codegen_flags: <defaults>
</compile_context>

<pallas_src>
import functools

import jax
import jax.numpy as jnp
from jax import lax
from jax.experimental import pallas as pl
from jax.experimental.pallas import tpu as pltpu


# ----------------------------- Pallas kernel ------------------------------ #
def encoder_kernel(
    x_ref,       # (1, S, D)        f32  input activations (batch element b)
    wqkv_ref,    # (1, D, 2*H*Dk + H*Dv) bf16  fused q|k|v projection
    bqkv_ref,    # (1, 1, 2*H*Dk + H*Dv) f32
    wo_ref,      # (1, H*Dv, D)     bf16
    bo_ref,      # (1, 1, D)        f32
    w1_ref,      # (1, D, Dff)      bf16
    b1_ref,      # (1, 1, Dff)      f32
    w2_ref,      # (1, Dff, D)      bf16
    b2_ref,      # (1, 1, D)        f32
    ln1w_ref,    # (1, S, D)        f32
    ln1b_ref,    # (1, S, D)        f32
    ln2w_ref,    # (1, S, D)        f32
    ln2b_ref,    # (1, S, D)        f32
    out_ref,     # (1, S, D)        f32
    act_ref,     # (S, D)           f32  VMEM scratch: activation carried over layers
    *,
    num_heads: int,
    d_k: int,
    d_v: int,
):
    layer = pl.program_id(1)
    n_layers = pl.num_programs(1)

    # Layer 0 for this batch element: seed the carried activation.
    @pl.when(layer == 0)
    def _():
        act_ref[...] = x_ref[0]

    x = act_ref[...]                       # (S, D) f32
    S, D = x.shape
    x_bf = x.astype(jnp.bfloat16)

    # ---- fused Q/K/V projection: one wide MXU pass for all heads ----------
    qkv = jnp.dot(x_bf, wqkv_ref[0], preferred_element_type=jnp.float32)
    qkv = qkv + bqkv_ref[0]                # (S, 2*H*Dk + H*Dv) f32

    k_base = num_heads * d_k
    v_base = 2 * num_heads * d_k
    inv_sqrt_dk = 1.0 / (d_k ** 0.5)
    dn_qkT = (((1,), (1,)), ((), ()))      # contract last axes: q @ k^T, no transpose

    wo = wo_ref[0]                         # (H*Dv, D) bf16, tiny — load once
    mha = jnp.zeros((S, D), jnp.float32)
    for h in range(num_heads):             # static unroll, num_heads is small
        q = qkv[:, h * d_k:(h + 1) * d_k]
        k = qkv[:, k_base + h * d_k:k_base + (h + 1) * d_k]
        v = qkv[:, v_base + h * d_v:v_base + (h + 1) * d_v]

        s = lax.dot_general(q.astype(jnp.bfloat16), k.astype(jnp.bfloat16),
                            dn_qkT, preferred_element_type=jnp.float32)
        s = s * inv_sqrt_dk
        s = s - jnp.max(s, axis=-1, keepdims=True)
        p = jnp.exp(s)
        p = p * pl.reciprocal(jnp.sum(p, axis=-1, keepdims=True), approx=True)

        head = jnp.dot(p.astype(jnp.bfloat16), v.astype(jnp.bfloat16),
                       preferred_element_type=jnp.float32)          # (S, Dv)
        # Fold head into the output projection — no lane-axis concat.
        mha = mha + jnp.dot(head.astype(jnp.bfloat16),
                            wo[h * d_v:(h + 1) * d_v, :],
                            preferred_element_type=jnp.float32)
    mha = mha + bo_ref[0]

    # ---- residual + LayerNorm over BOTH (S, D) dims (normalized_shape=[S,D]) ----
    y = x + mha
    mu1 = jnp.mean(y, keepdims=True)
    var1 = jnp.mean((y - mu1) ** 2, keepdims=True)
    y = (y - mu1) * lax.rsqrt(var1 + 1e-6) * ln1w_ref[0] + ln1b_ref[0]

    # ---- position-wise feed forward ----------------------------------------
    h1 = jnp.dot(y.astype(jnp.bfloat16), w1_ref[0],
                 preferred_element_type=jnp.float32) + b1_ref[0]
    h1 = jnp.maximum(h1, 0.0)
    ffn = jnp.dot(h1.astype(jnp.bfloat16), w2_ref[0],
                  preferred_element_type=jnp.float32) + b2_ref[0]

    # ---- residual + LayerNorm over (S, D) -----------------------------------
    z = y + ffn
    mu2 = jnp.mean(z, keepdims=True)
    var2 = jnp.mean((z - mu2) ** 2, keepdims=True)
    z = (z - mu2) * lax.rsqrt(var2 + 1e-6) * ln2w_ref[0] + ln2b_ref[0]

    act_ref[...] = z                       # carry to the next layer

    @pl.when(layer == n_layers - 1)
    def _():
        out_ref[0] = z


# ------------------------------- wrapper ----------------------------------- #
def encoder_forward_pallas(x, packed, *, num_heads, d_k, d_v):
    B, S, D = x.shape
    L = packed[0].shape[0]

    def layer_spec(arr):
        nd = arr.ndim
        return pl.BlockSpec((1,) + arr.shape[1:],
                            lambda b, l, _nd=nd: (l,) + (0,) * (_nd - 1))

    kernel = functools.partial(encoder_kernel,
                               num_heads=num_heads, d_k=d_k, d_v=d_v)

    return pl.pallas_call(
        kernel,
        out_shape=jax.ShapeDtypeStruct((B, S, D), jnp.float32),
        grid_spec=pltpu.PrefetchScalarGridSpec(
            num_scalar_prefetch=0,
            grid=(B, L),
            in_specs=[pl.BlockSpec((1, S, D), lambda b, l: (b, 0, 0))]
                     + [layer_spec(p) for p in packed],
            out_specs=pl.BlockSpec((1, S, D), lambda b, l: (b, 0, 0)),
            scratch_shapes=[pltpu.VMEM((S, D), jnp.float32)],
        ),
        compiler_params=pltpu.CompilerParams(
            dimension_semantics=("parallel", "arbitrary"),
            vmem_limit_bytes=32 * 1024 * 1024,
        ),
    )(x, *packed)


# ------------------------- parameter initialization ------------------------ #
def init_layer_params(key, S, D, H, Dk, Dv, Dff):
    ks = jax.random.split(key, 12)
    scale = 0.02
    wq = scale * jax.random.normal(ks[0], (H, D, Dk), jnp.float32)
    bq = scale * jax.random.normal(ks[1], (H, 1, Dk), jnp.float32)
    wk = scale * jax.random.normal(ks[2], (H, D, Dk), jnp.float32)
    bk = scale * jax.random.normal(ks[3], (H, 1, Dk), jnp.float32)
    wv = scale * jax.random.normal(ks[4], (H, D, Dv), jnp.float32)
    bv = scale * jax.random.normal(ks[5], (H, 1, Dv), jnp.float32)
    wo = scale * jax.random.normal(ks[6], (H * Dv, D), jnp.float32)
    bo = scale * jax.random.normal(ks[7], (1, D), jnp.float32)
    w1 = scale * jax.random.normal(ks[8], (D, Dff), jnp.float32)
    b1 = scale * jax.random.normal(ks[9], (1, Dff), jnp.float32)
    w2 = scale * jax.random.normal(ks[10], (Dff, D), jnp.float32)
    b2 = scale * jax.random.normal(ks[11], (1, D), jnp.float32)
    ln1w = jnp.ones((S, D), jnp.float32)
    ln1b = jnp.zeros((S, D), jnp.float32)
    ln2w = jnp.ones((S, D), jnp.float32)
    ln2b = jnp.zeros((S, D), jnp.float32)
    return (wq, bq, wk, bk, wv, bv, wo, bo, w1, b1, w2, b2,
            ln1w, ln1b, ln2w, ln2b)


def pack_encoder_params(all_params):
    """Fuse per-head q/k/v weights into one (D, 2*H*Dk + H*Dv) matrix per layer
    and stack all layers on a leading L axis.  Matmul weights are stored bf16
    (f32 accumulation in-kernel); biases / LN params stay f32."""
    wqkv_s, bqkv_s, wo_s, bo_s = [], [], [], []
    w1_s, b1_s, w2_s, b2_s = [], [], [], []
    ln1w_s, ln1b_s, ln2w_s, ln2b_s = [], [], [], []
    for params in all_params:
        (wq, bq, wk, bk, wv, bv, wo, bo, w1, b1, w2, b2,
         ln1w, ln1b, ln2w, ln2b) = params
        H, D, Dk = wq.shape
        Dv = wv.shape[-1]
        wq2 = jnp.transpose(wq, (1, 0, 2)).reshape(D, H * Dk)
        wk2 = jnp.transpose(wk, (1, 0, 2)).reshape(D, H * Dk)
        wv2 = jnp.transpose(wv, (1, 0, 2)).reshape(D, H * Dv)
        wqkv_s.append(jnp.concatenate([wq2, wk2, wv2], axis=-1))
        bqkv_s.append(jnp.concatenate([bq.reshape(1, H * Dk),
                                       bk.reshape(1, H * Dk),
                                       bv.reshape(1, H * Dv)], axis=-1))
        wo_s.append(wo); bo_s.append(bo)
        w1_s.append(w1); b1_s.append(b1)
        w2_s.append(w2); b2_s.append(b2)
        ln1w_s.append(ln1w); ln1b_s.append(ln1b)
        ln2w_s.append(ln2w); ln2b_s.append(ln2b)
    bf16, f32 = jnp.bfloat16, jnp.float32
    return (jnp.stack(wqkv_s).astype(bf16),
            jnp.stack(bqkv_s).astype(f32),
            jnp.stack(wo_s).astype(bf16),
            jnp.stack(bo_s).astype(f32),
            jnp.stack(w1_s).astype(bf16),
            jnp.stack(b1_s).astype(f32),
            jnp.stack(w2_s).astype(bf16),
            jnp.stack(b2_s).astype(f32),
            jnp.stack(ln1w_s).astype(f32), jnp.stack(ln1b_s).astype(f32),
            jnp.stack(ln2w_s).astype(f32), jnp.stack(ln2b_s).astype(f32))


# --------------------------- pure-JAX reference ---------------------------- #
def encoder_forward_ref(x, all_params, *, num_heads, d_k):
    def layernorm(y, w, b):
        mu = jnp.mean(y, axis=(-2, -1), keepdims=True)
        var = jnp.mean((y - mu) ** 2, axis=(-2, -1), keepdims=True)
        return (y - mu) / jnp.sqrt(var + 1e-6) * w + b

    for params in all_params:
        (wq, bq, wk, bk, wv, bv, wo, bo, w1, b1, w2, b2,
         ln1w, ln1b, ln2w, ln2b) = params
        heads = []
        for h in range(num_heads):
            q = x @ wq[h] + bq[h]
            k = x @ wk[h] + bk[h]
            v = x @ wv[h] + bv[h]
            s = (q @ jnp.swapaxes(k, -2, -1)) / (d_k ** 0.5)
            p = jax.nn.softmax(s, axis=-1)
            heads.append(p @ v)
        mha = jnp.concatenate(heads, axis=-1) @ wo + bo
        y = layernorm(x + mha, ln1w, ln1b)
        ffn = jnp.maximum(y @ w1 + b1, 0.0) @ w2 + b2
        x = layernorm(y + ffn, ln2w, ln2b)
    return x


# --------------------------------- main ------------------------------------ #
if __name__ == "__main__":
    B, S, D = 2, 8, 32
    H, Dk, Dv, Dff = 4, 8, 8, 64
    num_layers = 2

    key = jax.random.PRNGKey(0)
    kx, kp = jax.random.split(key)
    x = jax.random.normal(kx, (B, S, D), jnp.float32)

    layer_keys = jax.random.split(kp, num_layers)
    all_params = [init_layer_params(layer_keys[i], S, D, H, Dk, Dv, Dff)
                  for i in range(num_layers)]
    packed = pack_encoder_params(all_params)

    out = encoder_forward_pallas(x, packed, num_heads=H, d_k=Dk, d_v=Dv)
    out = jax.block_until_ready(out)

    ref = encoder_forward_ref(x, all_params, num_heads=H, d_k=Dk)
    assert out.shape == (B, S, D)
    # Tolerance loosened vs the pure-f32 reference: matmul operands run in
    # bf16 on the MXU (f32 accumulation); observed error is O(1e-3).
    assert jnp.allclose(out, ref, atol=2e-2, rtol=2e-2), "mismatch vs reference"

    print("KERNEL_OK")
</pallas_src>

<mosaic_0001>
module attributes {stable_mosaic.version = 11 : i64} {
  func.func @encoder_kernel(%arg0: i32, %arg1: i32, %arg2: memref<1x8x32xf32, #tpu.memory_space<vmem>>, %arg3: memref<1x32x96xbf16, #tpu.memory_space<vmem>>, %arg4: memref<1x1x96xf32, #tpu.memory_space<vmem>>, %arg5: memref<1x32x32xbf16, #tpu.memory_space<vmem>>, %arg6: memref<1x1x32xf32, #tpu.memory_space<vmem>>, %arg7: memref<1x32x64xbf16, #tpu.memory_space<vmem>>, %arg8: memref<1x1x64xf32, #tpu.memory_space<vmem>>, %arg9: memref<1x64x32xbf16, #tpu.memory_space<vmem>>, %arg10: memref<1x1x32xf32, #tpu.memory_space<vmem>>, %arg11: memref<1x8x32xf32, #tpu.memory_space<vmem>>, %arg12: memref<1x8x32xf32, #tpu.memory_space<vmem>>, %arg13: memref<1x8x32xf32, #tpu.memory_space<vmem>>, %arg14: memref<1x8x32xf32, #tpu.memory_space<vmem>>, %arg15: memref<1x8x32xf32, #tpu.memory_space<vmem>>, %arg16: memref<8x32xf32, #tpu.memory_space<vmem>>) attributes {dimension_semantics = [#tpu.dimension_semantics<parallel>, #tpu.dimension_semantics<arbitrary>], iteration_bounds = array<i64: 2, 2>, scalar_prefetch = 0 : i64, scratch_operands = 1 : i64, tpu.core_type = #tpu.core_type<tc>, window_params = [{transform_indices = @transform_0, window_bounds = array<i64: 1, 8, 32>}, {transform_indices = @transform_1, window_bounds = array<i64: 1, 32, 96>}, {transform_indices = @transform_2, window_bounds = array<i64: 1, 1, 96>}, {transform_indices = @transform_3, window_bounds = array<i64: 1, 32, 32>}, {transform_indices = @transform_4, window_bounds = array<i64: 1, 1, 32>}, {transform_indices = @transform_5, window_bounds = array<i64: 1, 32, 64>}, {transform_indices = @transform_6, window_bounds = array<i64: 1, 1, 64>}, {transform_indices = @transform_7, window_bounds = array<i64: 1, 64, 32>}, {transform_indices = @transform_8, window_bounds = array<i64: 1, 1, 32>}, {transform_indices = @transform_9, window_bounds = array<i64: 1, 8, 32>}, {transform_indices = @transform_10, window_bounds = array<i64: 1, 8, 32>}, {transform_indices = @transform_11, window_bounds = array<i64: 1, 8, 32>}, {transform_indices = @transform_12, window_bounds = array<i64: 1, 8, 32>}, {transform_indices = @transform_13, window_bounds = array<i64: 1, 8, 32>}]} {
    %c0_i32 = arith.constant 0 : i32
    %0 = arith.cmpi eq, %arg1, %c0_i32 : i32
    %1 = arith.extui %0 : i1 to i32
    %c0_i32_0 = arith.constant 0 : i32
    %2 = arith.cmpi ne, %1, %c0_i32_0 : i32
    scf.if %2 {
      %c0_79 = arith.constant 0 : index
      %c0_80 = arith.constant 0 : index
      %c0_81 = arith.constant 0 : index
      %203 = vector.load %arg2[%c0_79, %c0_80, %c0_81] : memref<1x8x32xf32, #tpu.memory_space<vmem>>, vector<1x8x32xf32>
      %204 = vector.shape_cast %203 : vector<1x8x32xf32> to vector<8x32xf32>
      %c0_82 = arith.constant 0 : index
      %c0_83 = arith.constant 0 : index
      %205 = vector.load %arg16[%c0_82, %c0_83] : memref<8x32xf32, #tpu.memory_space<vmem>>, vector<8x32xf32>
      tpu.vector_store %arg16[%c0_82, %c0_83], %204 {strides = array<i32>} : memref<8x32xf32, #tpu.memory_space<vmem>>, vector<8x32xf32>,
    } else {
    }
    %c0 = arith.constant 0 : index
    %c0_1 = arith.constant 0 : index
    %3 = vector.load %arg16[%c0, %c0_1] : memref<8x32xf32, #tpu.memory_space<vmem>>, vector<8x32xf32>
    %4 = arith.truncf %3 : vector<8x32xf32> to vector<8x32xbf16>
    %c0_2 = arith.constant 0 : index
    %c0_3 = arith.constant 0 : index
    %c0_4 = arith.constant 0 : index
    %5 = vector.load %arg3[%c0_2, %c0_3, %c0_4] : memref<1x32x96xbf16, #tpu.memory_space<vmem>>, vector<1x32x96xbf16>
    %6 = vector.shape_cast %5 : vector<1x32x96xbf16> to vector<32x96xbf16>
    %cst = arith.constant dense<0.000000e+00> : vector<8x96xf32>
    %7 = tpu.matmul %4, %6, %cst {dimension_numbers = #tpu.dot_dimension_numbers<[1], [0], [0], [1], [0, 0, 1, 1], [], []>} : vector<8x32xbf16>, vector<32x96xbf16>, vector<8x96xf32> -> vector<8x96xf32>
    %c0_5 = arith.constant 0 : index
    %c0_6 = arith.constant 0 : index
    %c0_7 = arith.constant 0 : index
    %8 = vector.load %arg4[%c0_5, %c0_6, %c0_7] : memref<1x1x96xf32, #tpu.memory_space<vmem>>, vector<1x1x96xf32>
    %9 = vector.shape_cast %8 : vector<1x1x96xf32> to vector<1x96xf32>
    %10 = vector.broadcast %9 : vector<1x96xf32> to vector<8x96xf32>
    %11 = arith.addf %7, %10 : vector<8x96xf32>
    %c0_8 = arith.constant 0 : index
    %c0_9 = arith.constant 0 : index
    %c0_10 = arith.constant 0 : index
    %12 = vector.load %arg5[%c0_8, %c0_9, %c0_10] : memref<1x32x32xbf16, #tpu.memory_space<vmem>>, vector<1x32x32xbf16>
    %13 = vector.shape_cast %12 : vector<1x32x32xbf16> to vector<32x32xbf16>
    %cst_11 = arith.constant 0.000000e+00 : f32
    %14 = vector.broadcast %cst_11 : f32 to vector<8x32xf32>
    %15 = vector.extract_strided_slice %11 {offsets = [0, 0], sizes = [8, 8], strides = [1, 1]} : vector<8x96xf32> to vector<8x8xf32>
    %16 = vector.extract_strided_slice %11 {offsets = [0, 32], sizes = [8, 8], strides = [1, 1]} : vector<8x96xf32> to vector<8x8xf32>
    %17 = vector.extract_strided_slice %11 {offsets = [0, 64], sizes = [8, 8], strides = [1, 1]} : vector<8x96xf32> to vector<8x8xf32>
    %18 = arith.truncf %15 : vector<8x8xf32> to vector<8x8xbf16>
    %19 = arith.truncf %16 : vector<8x8xf32> to vector<8x8xbf16>
    %cst_12 = arith.constant dense<0.000000e+00> : vector<8x8xf32>
    %20 = tpu.matmul %18, %19, %cst_12 {dimension_numbers = #tpu.dot_dimension_numbers<[1], [1], [0], [0], [0, 0, 1, 0], [], []>} : vector<8x8xbf16>, vector<8x8xbf16>, vector<8x8xf32> -> vector<8x8xf32>
    %cst_13 = arith.constant 0.353553385 : f32
    %21 = vector.broadcast %cst_13 : f32 to vector<8x8xf32>
    %22 = arith.mulf %20, %21 : vector<8x8xf32>
    %cst_14 = arith.constant dense<0xFF800000> : vector<8xf32>
    %23 = vector.multi_reduction <maximumf>, %22, %cst_14 [1] : vector<8x8xf32> to vector<8xf32>
    %24 = vector.shape_cast %23 : vector<8xf32> to vector<8x1xf32>
    %25 = vector.broadcast %24 : vector<8x1xf32> to vector<8x8xf32>
    %26 = arith.subf %22, %25 : vector<8x8xf32>
    %27 = math.exp %26 : vector<8x8xf32>
    %cst_15 = arith.constant dense<0.000000e+00> : vector<8xf32>
    %28 = vector.multi_reduction <add>, %27, %cst_15 [1] : vector<8x8xf32> to vector<8xf32>
    %29 = vector.shape_cast %28 : vector<8xf32> to vector<8x1xf32>
    %30 = tpu.reciprocal %29 {approx = true} : vector<8x1xf32> -> vector<8x1xf32>
    %31 = vector.broadcast %30 : vector<8x1xf32> to vector<8x8xf32>
    %32 = arith.mulf %27, %31 : vector<8x8xf32>
    %33 = arith.truncf %32 : vector<8x8xf32> to vector<8x8xbf16>
    %34 = arith.truncf %17 : vector<8x8xf32> to vector<8x8xbf16>
    %cst_16 = arith.constant dense<0.000000e+00> : vector<8x8xf32>
    %35 = tpu.matmul %33, %34, %cst_16 {dimension_numbers = #tpu.dot_dimension_numbers<[1], [0], [0], [1], [0, 0, 1, 1], [], []>} : vector<8x8xbf16>, vector<8x8xbf16>, vector<8x8xf32> -> vector<8x8xf32>
    %36 = arith.truncf %35 : vector<8x8xf32> to vector<8x8xbf16>
    %37 = vector.extract_strided_slice %13 {offsets = [0, 0], sizes = [8, 32], strides = [1, 1]} : vector<32x32xbf16> to vector<8x32xbf16>
    %cst_17 = arith.constant dense<0.000000e+00> : vector<8x32xf32>
    %38 = tpu.matmul %36, %37, %cst_17 {dimension_numbers = #tpu.dot_dimension_numbers<[1], [0], [0], [1], [0, 0, 1, 1], [], []>} : vector<8x8xbf16>, vector<8x32xbf16>, vector<8x32xf32> -> vector<8x32xf32>
    %39 = arith.addf %14, %38 : vector<8x32xf32>
    %40 = vector.extract_strided_slice %11 {offsets = [0, 8], sizes = [8, 8], strides = [1, 1]} : vector<8x96xf32> to vector<8x8xf32>
    %41 = vector.extract_strided_slice %11 {offsets = [0, 40], sizes = [8, 8], strides = [1, 1]} : vector<8x96xf32> to vector<8x8xf32>
    %42 = vector.extract_strided_slice %11 {offsets = [0, 72], sizes = [8, 8], strides = [1, 1]} : vector<8x96xf32> to vector<8x8xf32>
    %43 = arith.truncf %40 : vector<8x8xf32> to vector<8x8xbf16>
    %44 = arith.truncf %41 : vector<8x8xf32> to vector<8x8xbf16>
    %cst_18 = arith.constant dense<0.000000e+00> : vector<8x8xf32>
    %45 = tpu.matmul %43, %44, %cst_18 {dimension_numbers = #tpu.dot_dimension_numbers<[1], [1], [0], [0], [0, 0, 1, 0], [], []>} : vector<8x8xbf16>, vector<8x8xbf16>, vector<8x8xf32> -> vector<8x8xf32>
    %cst_19 = arith.constant 0.353553385 : f32
    %46 = vector.broadcast %cst_19 : f32 to vector<8x8xf32>
    %47 = arith.mulf %45, %46 : vector<8x8xf32>
    %cst_20 = arith.constant dense<0xFF800000> : vector<8xf32>
    %48 = vector.multi_reduction <maximumf>, %47, %cst_20 [1] : vector<8x8xf32> to vector<8xf32>
    %49 = vector.shape_cast %48 : vector<8xf32> to vector<8x1xf32>
    %50 = vector.broadcast %49 : vector<8x1xf32> to vector<8x8xf32>
    %51 = arith.subf %47, %50 : vector<8x8xf32>
    %52 = math.exp %51 : vector<8x8xf32>
    %cst_21 = arith.constant dense<0.000000e+00> : vector<8xf32>
    %53 = vector.multi_reduction <add>, %52, %cst_21 [1] : vector<8x8xf32> to vector<8xf32>
    %54 = vector.shape_cast %53 : vector<8xf32> to vector<8x1xf32>
    %55 = tpu.reciprocal %54 {approx = true} : vector<8x1xf32> -> vector<8x1xf32>
    %56 = vector.broadcast %55 : vector<8x1xf32> to vector<8x8xf32>
    %57 = arith.mulf %52, %56 : vector<8x8xf32>
    %58 = arith.truncf %57 : vector<8x8xf32> to vector<8x8xbf16>
    %59 = arith.truncf %42 : vector<8x8xf32> to vector<8x8xbf16>
    %cst_22 = arith.constant dense<0.000000e+00> : vector<8x8xf32>
    %60 = tpu.matmul %58, %59, %cst_22 {dimension_numbers = #tpu.dot_dimension_numbers<[1], [0], [0], [1], [0, 0, 1, 1], [], []>} : vector<8x8xbf16>, vector<8x8xbf16>, vector<8x8xf32> -> vector<8x8xf32>
    %61 = arith.truncf %60 : vector<8x8xf32> to vector<8x8xbf16>
    %62 = vector.extract_strided_slice %13 {offsets = [8, 0], sizes = [8, 32], strides = [1, 1]} : vector<32x32xbf16> to vector<8x32xbf16>
    %cst_23 = arith.constant dense<0.000000e+00> : vector<8x32xf32>
    %63 = tpu.matmul %61, %62, %cst_23 {dimension_numbers = #tpu.dot_dimension_numbers<[1], [0], [0], [1], [0, 0, 1, 1], [], []>} : vector<8x8xbf16>, vector<8x32xbf16>, vector<8x32xf32> -> vector<8x32xf32>
    %64 = arith.addf %39, %63 : vector<8x32xf32>
    %65 = vector.extract_strided_slice %11 {offsets = [0, 16], sizes = [8, 8], strides = [1, 1]} : vector<8x96xf32> to vector<8x8xf32>
    %66 = vector.extract_strided_slice %11 {offsets = [0, 48], sizes = [8, 8], strides = [1, 1]} : vector<8x96xf32> to vector<8x8xf32>
    %67 = vector.extract_strided_slice %11 {offsets = [0, 80], sizes = [8, 8], strides = [1, 1]} : vector<8x96xf32> to vector<8x8xf32>
    %68 = arith.truncf %65 : vector<8x8xf32> to vector<8x8xbf16>
    %69 = arith.truncf %66 : vector<8x8xf32> to vector<8x8xbf16>
    %cst_24 = arith.constant dense<0.000000e+00> : vector<8x8xf32>
    %70 = tpu.matmul %68, %69, %cst_24 {dimension_numbers = #tpu.dot_dimension_numbers<[1], [1], [0], [0], [0, 0, 1, 0], [], []>} : vector<8x8xbf16>, vector<8x8xbf16>, vector<8x8xf32> -> vector<8x8xf32>
    %cst_25 = arith.constant 0.353553385 : f32
    %71 = vector.broadcast %cst_25 : f32 to vector<8x8xf32>
    %72 = arith.mulf %70, %71 : vector<8x8xf32>
    %cst_26 = arith.constant dense<0xFF800000> : vector<8xf32>
    %73 = vector.multi_reduction <maximumf>, %72, %cst_26 [1] : vector<8x8xf32> to vector<8xf32>
    %74 = vector.shape_cast %73 : vector<8xf32> to vector<8x1xf32>
    %75 = vector.broadcast %74 : vector<8x1xf32> to vector<8x8xf32>
    %76 = arith.subf %72, %75 : vector<8x8xf32>
    %77 = math.exp %76 : vector<8x8xf32>
    %cst_27 = arith.constant dense<0.000000e+00> : vector<8xf32>
    %78 = vector.multi_reduction <add>, %77, %cst_27 [1] : vector<8x8xf32> to vector<8xf32>
    %79 = vector.shape_cast %78 : vector<8xf32> to vector<8x1xf32>
    %80 = tpu.reciprocal %79 {approx = true} : vector<8x1xf32> -> vector<8x1xf32>
    %81 = vector.broadcast %80 : vector<8x1xf32> to vector<8x8xf32>
    %82 = arith.mulf %77, %81 : vector<8x8xf32>
    %83 = arith.truncf %82 : vector<8x8xf32> to vector<8x8xbf16>
    %84 = arith.truncf %67 : vector<8x8xf32> to vector<8x8xbf16>
    %cst_28 = arith.constant dense<0.000000e+00> : vector<8x8xf32>
    %85 = tpu.matmul %83, %84, %cst_28 {dimension_numbers = #tpu.dot_dimension_numbers<[1], [0], [0], [1], [0, 0, 1, 1], [], []>} : vector<8x8xbf16>, vector<8x8xbf16>, vector<8x8xf32> -> vector<8x8xf32>
    %86 = arith.truncf %85 : vector<8x8xf32> to vector<8x8xbf16>
    %87 = vector.extract_strided_slice %13 {offsets = [16, 0], sizes = [8, 32], strides = [1, 1]} : vector<32x32xbf16> to vector<8x32xbf16>
    %cst_29 = arith.constant dense<0.000000e+00> : vector<8x32xf32>
    %88 = tpu.matmul %86, %87, %cst_29 {dimension_numbers = #tpu.dot_dimension_numbers<[1], [0], [0], [1], [0, 0, 1, 1], [], []>} : vector<8x8xbf16>, vector<8x32xbf16>, vector<8x32xf32> -> vector<8x32xf32>
    %89 = arith.addf %64, %88 : vector<8x32xf32>
    %90 = vector.extract_strided_slice %11 {offsets = [0, 24], sizes = [8, 8], strides = [1, 1]} : vector<8x96xf32> to vector<8x8xf32>
    %91 = vector.extract_strided_slice %11 {offsets = [0, 56], sizes = [8, 8], strides = [1, 1]} : vector<8x96xf32> to vector<8x8xf32>
    %92 = vector.extract_strided_slice %11 {offsets = [0, 88], sizes = [8, 8], strides = [1, 1]} : vector<8x96xf32> to vector<8x8xf32>
    %93 = arith.truncf %90 : vector<8x8xf32> to vector<8x8xbf16>
    %94 = arith.truncf %91 : vector<8x8xf32> to vector<8x8xbf16>
    %cst_30 = arith.constant dense<0.000000e+00> : vector<8x8xf32>
    %95 = tpu.matmul %93, %94, %cst_30 {dimension_numbers = #tpu.dot_dimension_numbers<[1], [1], [0], [0], [0, 0, 1, 0], [], []>} : vector<8x8xbf16>, vector<8x8xbf16>, vector<8x8xf32> -> vector<8x8xf32>
    %cst_31 = arith.constant 0.353553385 : f32
    %96 = vector.broadcast %cst_31 : f32 to vector<8x8xf32>
    %97 = arith.mulf %95, %96 : vector<8x8xf32>
    %cst_32 = arith.constant dense<0xFF800000> : vector<8xf32>
    %98 = vector.multi_reduction <maximumf>, %97, %cst_32 [1] : vector<8x8xf32> to vector<8xf32>
    %99 = vector.shape_cast %98 : vector<8xf32> to vector<8x1xf32>
    %100 = vector.broadcast %99 : vector<8x1xf32> to vector<8x8xf32>
    %101 = arith.subf %97, %100 : vector<8x8xf32>
    %102 = math.exp %101 : vector<8x8xf32>
    %cst_33 = arith.constant dense<0.000000e+00> : vector<8xf32>
    %103 = vector.multi_reduction <add>, %102, %cst_33 [1] : vector<8x8xf32> to vector<8xf32>
    %104 = vector.shape_cast %103 : vector<8xf32> to vector<8x1xf32>
    %105 = tpu.reciprocal %104 {approx = true} : vector<8x1xf32> -> vector<8x1xf32>
    %106 = vector.broadcast %105 : vector<8x1xf32> to vector<8x8xf32>
    %107 = arith.mulf %102, %106 : vector<8x8xf32>
    %108 = arith.truncf %107 : vector<8x8xf32> to vector<8x8xbf16>
    %109 = arith.truncf %92 : vector<8x8xf32> to vector<8x8xbf16>
    %cst_34 = arith.constant dense<0.000000e+00> : vector<8x8xf32>
    %110 = tpu.matmul %108, %109, %cst_34 {dimension_numbers = #tpu.dot_dimension_numbers<[1], [0], [0], [1], [0, 0, 1, 1], [], []>} : vector<8x8xbf16>, vector<8x8xbf16>, vector<8x8xf32> -> vector<8x8xf32>
    %111 = arith.truncf %110 : vector<8x8xf32> to vector<8x8xbf16>
    %112 = vector.extract_strided_slice %13 {offsets = [24, 0], sizes = [8, 32], strides = [1, 1]} : vector<32x32xbf16> to vector<8x32xbf16>
    %cst_35 = arith.constant dense<0.000000e+00> : vector<8x32xf32>
    %113 = tpu.matmul %111, %112, %cst_35 {dimension_numbers = #tpu.dot_dimension_numbers<[1], [0], [0], [1], [0, 0, 1, 1], [], []>} : vector<8x8xbf16>, vector<8x32xbf16>, vector<8x32xf32> -> vector<8x32xf32>
    %114 = arith.addf %89, %113 : vector<8x32xf32>
    %c0_36 = arith.constant 0 : index
    %c0_37 = arith.constant 0 : index
    %c0_38 = arith.constant 0 : index
    %115 = vector.load %arg6[%c0_36, %c0_37, %c0_38] : memref<1x1x32xf32, #tpu.memory_space<vmem>>, vector<1x1x32xf32>
    %116 = vector.shape_cast %115 : vector<1x1x32xf32> to vector<1x32xf32>
    %117 = vector.broadcast %116 : vector<1x32xf32> to vector<8x32xf32>
    %118 = arith.addf %114, %117 : vector<8x32xf32>
    %119 = arith.addf %3, %118 : vector<8x32xf32>
    %120 = vector.shape_cast %119 : vector<8x32xf32> to vector<1x8x32xf32>
    %cst_39 = arith.constant dense<0.000000e+00> : vector<1xf32>
    %121 = vector.multi_reduction <add>, %120, %cst_39 [1, 2] : vector<1x8x32xf32> to vector<1xf32>
    %122 = vector.shape_cast %121 : vector<1xf32> to vector<1x1x1xf32>
    %123 = vector.extract %122[0, 0, 0] : f32 from vector<1x1x1xf32>
    %124 = vector.broadcast %123 : f32 to vector<1x1xf32>
    %cst_40 = arith.constant 2.560000e+02 : f32
    %125 = vector.broadcast %cst_40 : f32 to vector<1x1xf32>
    %126 = arith.divf %124, %125 : vector<1x1xf32>
    %127 = vector.broadcast %126 : vector<1x1xf32> to vector<8x32xf32>
    %128 = arith.subf %119, %127 : vector<8x32xf32>
    %129 = arith.mulf %128, %128 : vector<8x32xf32>
    %130 = vector.shape_cast %129 : vector<8x32xf32> to vector<1x8x32xf32>
    %cst_41 = arith.constant dense<0.000000e+00> : vector<1xf32>
    %131 = vector.multi_reduction <add>, %130, %cst_41 [1, 2] : vector<1x8x32xf32> to vector<1xf32>
    %132 = vector.shape_cast %131 : vector<1xf32> to vector<1x1x1xf32>
    %133 = vector.extract %132[0, 0, 0] : f32 from vector<1x1x1xf32>
    %134 = vector.broadcast %133 : f32 to vector<1x1xf32>
    %cst_42 = arith.constant 2.560000e+02 : f32
    %135 = vector.broadcast %cst_42 : f32 to vector<1x1xf32>
    %136 = arith.divf %134, %135 : vector<1x1xf32>
    %137 = vector.broadcast %126 : vector<1x1xf32> to vector<8x32xf32>
    %138 = arith.subf %119, %137 : vector<8x32xf32>
    %cst_43 = arith.constant 9.99999997E-7 : f32
    %139 = vector.broadcast %cst_43 : f32 to vector<1x1xf32>
    %140 = arith.addf %136, %139 : vector<1x1xf32>
    %141 = math.rsqrt %140 : vector<1x1xf32>
    %142 = vector.broadcast %141 : vector<1x1xf32> to vector<8x32xf32>
    %143 = arith.mulf %138, %142 : vector<8x32xf32>
    %c0_44 = arith.constant 0 : index
    %c0_45 = arith.constant 0 : index
    %c0_46 = arith.constant 0 : index
    %144 = vector.load %arg11[%c0_44, %c0_45, %c0_46] : memref<1x8x32xf32, #tpu.memory_space<vmem>>, vector<1x8x32xf32>
    %145 = vector.shape_cast %144 : vector<1x8x32xf32> to vector<8x32xf32>
    %146 = arith.mulf %143, %145 : vector<8x32xf32>
    %c0_47 = arith.constant 0 : index
    %c0_48 = arith.constant 0 : index
    %c0_49 = arith.constant 0 : index
    %147 = vector.load %arg12[%c0_47, %c0_48, %c0_49] : memref<1x8x32xf32, #tpu.memory_space<vmem>>, vector<1x8x32xf32>
    %148 = vector.shape_cast %147 : vector<1x8x32xf32> to vector<8x32xf32>
    %149 = arith.addf %146, %148 : vector<8x32xf32>
    %150 = arith.truncf %149 : vector<8x32xf32> to vector<8x32xbf16>
    %c0_50 = arith.constant 0 : index
    %c0_51 = arith.constant 0 : index
    %c0_52 = arith.constant 0 : index
    %151 = vector.load %arg7[%c0_50, %c0_51, %c0_52] : memref<1x32x64xbf16, #tpu.memory_space<vmem>>, vector<1x32x64xbf16>
    %152 = vector.shape_cast %151 : vector<1x32x64xbf16> to vector<32x64xbf16>
    %cst_53 = arith.constant dense<0.000000e+00> : vector<8x64xf32>
    %153 = tpu.matmul %150, %152, %cst_53 {dimension_numbers = #tpu.dot_dimension_numbers<[1], [0], [0], [1], [0, 0, 1, 1], [], []>} : vector<8x32xbf16>, vector<32x64xbf16>, vector<8x64xf32> -> vector<8x64xf32>
    %c0_54 = arith.constant 0 : index
    %c0_55 = arith.constant 0 : index
    %c0_56 = arith.constant 0 : index
    %154 = vector.load %arg8[%c0_54, %c0_55, %c0_56] : memref<1x1x64xf32, #tpu.memory_space<vmem>>, vector<1x1x64xf32>
    %155 = vector.shape_cast %154 : vector<1x1x64xf32> to vector<1x64xf32>
    %156 = vector.broadcast %155 : vector<1x64xf32> to vector<8x64xf32>
    %157 = arith.addf %153, %156 : vector<8x64xf32>
    %cst_57 = arith.constant 0.000000e+00 : f32
    %158 = vector.broadcast %cst_57 : f32 to vector<8x64xf32>
    %159 = arith.maximumf %157, %158 : vector<8x64xf32>
    %160 = arith.truncf %159 : vector<8x64xf32> to vector<8x64xbf16>
    %c0_58 = arith.constant 0 : index
    %c0_59 = arith.constant 0 : index
    %c0_60 = arith.constant 0 : index
    %161 = vector.load %arg9[%c0_58, %c0_59, %c0_60] : memref<1x64x32xbf16, #tpu.memory_space<vmem>>, vector<1x64x32xbf16>
    %162 = vector.shape_cast %161 : vector<1x64x32xbf16> to vector<64x32xbf16>
    %cst_61 = arith.constant dense<0.000000e+00> : vector<8x32xf32>
    %163 = tpu.matmul %160, %162, %cst_61 {dimension_numbers = #tpu.dot_dimension_numbers<[1], [0], [0], [1], [0, 0, 1, 1], [], []>} : vector<8x64xbf16>, vector<64x32xbf16>, vector<8x32xf32> -> vector<8x32xf32>
    %c0_62 = arith.constant 0 : index
    %c0_63 = arith.constant 0 : index
    %c0_64 = arith.constant 0 : index
    %164 = vector.load %arg10[%c0_62, %c0_63, %c0_64] : memref<1x1x32xf32, #tpu.memory_space<vmem>>, vector<1x1x32xf32>
    %165 = vector.shape_cast %164 : vector<1x1x32xf32> to vector<1x32xf32>
    %166 = vector.broadcast %165 : vector<1x32xf32> to vector<8x32xf32>
    %167 = arith.addf %163, %166 : vector<8x32xf32>
    %168 = arith.addf %149, %167 : vector<8x32xf32>
    %169 = vector.shape_cast %168 : vector<8x32xf32> to vector<1x8x32xf32>
    %cst_65 = arith.constant dense<0.000000e+00> : vector<1xf32>
    %170 = vector.multi_reduction <add>, %169, %cst_65 [1, 2] : vector<1x8x32xf32> to vector<1xf32>
    %171 = vector.shape_cast %170 : vector<1xf32> to vector<1x1x1xf32>
    %172 = vector.extract %171[0, 0, 0] : f32 from vector<1x1x1xf32>
    %173 = vector.broadcast %172 : f32 to vector<1x1xf32>
    %cst_66 = arith.constant 2.560000e+02 : f32
    %174 = vector.broadcast %cst_66 : f32 to vector<1x1xf32>
    %175 = arith.divf %173, %174 : vector<1x1xf32>
    %176 = vector.broadcast %175 : vector<1x1xf32> to vector<8x32xf32>
    %177 = arith.subf %168, %176 : vector<8x32xf32>
    %178 = arith.mulf %177, %177 : vector<8x32xf32>
    %179 = vector.shape_cast %178 : vector<8x32xf32> to vector<1x8x32xf32>
    %cst_67 = arith.constant dense<0.000000e+00> : vector<1xf32>
    %180 = vector.multi_reduction <add>, %179, %cst_67 [1, 2] : vector<1x8x32xf32> to vector<1xf32>
    %181 = vector.shape_cast %180 : vector<1xf32> to vector<1x1x1xf32>
    %182 = vector.extract %181[0, 0, 0] : f32 from vector<1x1x1xf32>
    %183 = vector.broadcast %182 : f32 to vector<1x1xf32>
    %cst_68 = arith.constant 2.560000e+02 : f32
    %184 = vector.broadcast %cst_68 : f32 to vector<1x1xf32>
    %185 = arith.divf %183, %184 : vector<1x1xf32>
    %186 = vector.broadcast %175 : vector<1x1xf32> to vector<8x32xf32>
    %187 = arith.subf %168, %186 : vector<8x32xf32>
    %cst_69 = arith.constant 9.99999997E-7 : f32
    %188 = vector.broadcast %cst_69 : f32 to vector<1x1xf32>
    %189 = arith.addf %185, %188 : vector<1x1xf32>
    %190 = math.rsqrt %189 : vector<1x1xf32>
    %191 = vector.broadcast %190 : vector<1x1xf32> to vector<8x32xf32>
    %192 = arith.mulf %187, %191 : vector<8x32xf32>
    %c0_70 = arith.constant 0 : index
    %c0_71 = arith.constant 0 : index
    %c0_72 = arith.constant 0 : index
    %193 = vector.load %arg13[%c0_70, %c0_71, %c0_72] : memref<1x8x32xf32, #tpu.memory_space<vmem>>, vector<1x8x32xf32>
    %194 = vector.shape_cast %193 : vector<1x8x32xf32> to vector<8x32xf32>
    %195 = arith.mulf %192, %194 : vector<8x32xf32>
    %c0_73 = arith.constant 0 : index
    %c0_74 = arith.constant 0 : index
    %c0_75 = arith.constant 0 : index
    %196 = vector.load %arg14[%c0_73, %c0_74, %c0_75] : memref<1x8x32xf32, #tpu.memory_space<vmem>>, vector<1x8x32xf32>
    %197 = vector.shape_cast %196 : vector<1x8x32xf32> to vector<8x32xf32>
    %198 = arith.addf %195, %197 : vector<8x32xf32>
    %c0_76 = arith.constant 0 : index
    %c0_77 = arith.constant 0 : index
    %199 = vector.load %arg16[%c0_76, %c0_77] : memref<8x32xf32, #tpu.memory_space<vmem>>, vector<8x32xf32>
    tpu.vector_store %arg16[%c0_76, %c0_77], %198 {strides = array<i32>} : memref<8x32xf32, #tpu.memory_space<vmem>>, vector<8x32xf32>,
    %c1_i32 = arith.constant 1 : i32
    %200 = arith.cmpi eq, %arg1, %c1_i32 : i32
    %201 = arith.extui %200 : i1 to i32
    %c0_i32_78 = arith.constant 0 : i32
    %202 = arith.cmpi ne, %201, %c0_i32_78 : i32
    scf.if %202 {
      %c0_79 = arith.constant 0 : index
      %c0_80 = arith.constant 0 : index
      %c0_81 = arith.constant 0 : index
      %203 = vector.load %arg15[%c0_79, %c0_80, %c0_81] : memref<1x8x32xf32, #tpu.memory_space<vmem>>, vector<1x8x32xf32>
      %204 = vector.shape_cast %203 : vector<1x8x32xf32> to vector<8x32xf32>
      %205 = vector.shape_cast %198 : vector<8x32xf32> to vector<1x8x32xf32>
      tpu.vector_store %arg15[%c0_79, %c0_80, %c0_81], %205 {strides = array<i32>} : memref<1x8x32xf32, #tpu.memory_space<vmem>>, vector<1x8x32xf32>,
    } else {
    }
    return
  }
  func.func @transform_0(%arg0: i32, %arg1: i32) -> (i32, i32, i32) {
    %c0_i32 = arith.constant 0 : i32
    %c0_i32_0 = arith.constant 0 : i32
    %c0_i32_1 = arith.constant 0 : i32
    return %arg0, %c0_i32, %c0_i32_0 : i32, i32, i32
  }
  func.func @transform_1(%arg0: i32, %arg1: i32) -> (i32, i32, i32) {
    %c0_i32 = arith.constant 0 : i32
    %c0_i32_0 = arith.constant 0 : i32
    %c0_i32_1 = arith.constant 0 : i32
    return %arg1, %c0_i32, %c0_i32_0 : i32, i32, i32
  }
  func.func @transform_2(%arg0: i32, %arg1: i32) -> (i32, i32, i32) {
    %c0_i32 = arith.constant 0 : i32
    %c0_i32_0 = arith.constant 0 : i32
    %c0_i32_1 = arith.constant 0 : i32
    return %arg1, %c0_i32, %c0_i32_0 : i32, i32, i32
  }
  func.func @transform_3(%arg0: i32, %arg1: i32) -> (i32, i32, i32) {
    %c0_i32 = arith.constant 0 : i32
    %c0_i32_0 = arith.constant 0 : i32
    %c0_i32_1 = arith.constant 0 : i32
    return %arg1, %c0_i32, %c0_i32_0 : i32, i32, i32
  }
  func.func @transform_4(%arg0: i32, %arg1: i32) -> (i32, i32, i32) {
    %c0_i32 = arith.constant 0 : i32
    %c0_i32_0 = arith.constant 0 : i32
    %c0_i32_1 = arith.constant 0 : i32
    return %arg1, %c0_i32, %c0_i32_0 : i32, i32, i32
  }
  func.func @transform_5(%arg0: i32, %arg1: i32) -> (i32, i32, i32) {
    %c0_i32 = arith.constant 0 : i32
    %c0_i32_0 = arith.constant 0 : i32
    %c0_i32_1 = arith.constant 0 : i32
    return %arg1, %c0_i32, %c0_i32_0 : i32, i32, i32
  }
  func.func @transform_6(%arg0: i32, %arg1: i32) -> (i32, i32, i32) {
    %c0_i32 = arith.constant 0 : i32
    %c0_i32_0 = arith.constant 0 : i32
    %c0_i32_1 = arith.constant 0 : i32
    return %arg1, %c0_i32, %c0_i32_0 : i32, i32, i32
  }
  func.func @transform_7(%arg0: i32, %arg1: i32) -> (i32, i32, i32) {
    %c0_i32 = arith.constant 0 : i32
    %c0_i32_0 = arith.constant 0 : i32
    %c0_i32_1 = arith.constant 0 : i32
    return %arg1, %c0_i32, %c0_i32_0 : i32, i32, i32
  }
  func.func @transform_8(%arg0: i32, %arg1: i32) -> (i32, i32, i32) {
    %c0_i32 = arith.constant 0 : i32
    %c0_i32_0 = arith.constant 0 : i32
    %c0_i32_1 = arith.constant 0 : i32
    return %arg1, %c0_i32, %c0_i32_0 : i32, i32, i32
  }
  func.func @transform_9(%arg0: i32, %arg1: i32) -> (i32, i32, i32) {
    %c0_i32 = arith.constant 0 : i32
    %c0_i32_0 = arith.constant 0 : i32
    %c0_i32_1 = arith.constant 0 : i32
    return %arg1, %c0_i32, %c0_i32_0 : i32, i32, i32
  }
  func.func @transform_10(%arg0: i32, %arg1: i32) -> (i32, i32, i32) {
    %c0_i32 = arith.constant 0 : i32
    %c0_i32_0 = arith.constant 0 : i32
    %c0_i32_1 = arith.constant 0 : i32
    return %arg1, %c0_i32, %c0_i32_0 : i32, i32, i32
  }
  func.func @transform_11(%arg0: i32, %arg1: i32) -> (i32, i32, i32) {
    %c0_i32 = arith.constant 0 : i32
    %c0_i32_0 = arith.constant 0 : i32
    %c0_i32_1 = arith.constant 0 : i32
    return %arg1, %c0_i32, %c0_i32_0 : i32, i32, i32
  }
  func.func @transform_12(%arg0: i32, %arg1: i32) -> (i32, i32, i32) {
    %c0_i32 = arith.constant 0 : i32
    %c0_i32_0 = arith.constant 0 : i32
    %c0_i32_1 = arith.constant 0 : i32
    return %arg1, %c0_i32, %c0_i32_0 : i32, i32, i32
  }
  func.func @transform_13(%arg0: i32, %arg1: i32) -> (i32, i32, i32) {
    %c0_i32 = arith.constant 0 : i32
    %c0_i32_0 = arith.constant 0 : i32
    %c0_i32_1 = arith.constant 0 : i32
    return %arg0, %c0_i32, %c0_i32_0 : i32, i32, i32
  }
}

</mosaic_0001>

<llo_original>
// kernel: tpu_custom_call.1
$region0: #{tpu_custom_call.1}
  #allocation0 [shape = 'u32[]', space=smem, size = 0x4, offset = 0x4, fixed_abs, tag = 'smem constant byte address 0x4 - core index']
  #allocation1 [shape = 'u32[72,128]{1,0:T(1,128)}', space=vmem, size = 0x9000, scoped, tag = 'internal scratch']
  #allocation2 [shape = 'f32[8,32]{1,0:T(8,128)}', space=vmem, size = 0x1000, scoped, tag = 'scratch operand']
  %s0 = inlined_call_operand.hbm [shape: f32[2,8,32], index: 0, kind: input, shape index: {}]
  %s1 = inlined_call_operand.vmem [shape: bf16[2,32,96], index: 1, kind: input, shape index: {}]
  %s2 = inlined_call_operand.hbm [shape: f32[2,1,96], index: 2, kind: input, shape index: {}]
  %s3 = inlined_call_operand.vmem [shape: bf16[2,32,32], index: 3, kind: input, shape index: {}]
  %s4 = inlined_call_operand.vmem [shape: f32[2,1,32], index: 4, kind: input, shape index: {}]
  %s5 = inlined_call_operand.vmem [shape: bf16[2,32,64], index: 5, kind: input, shape index: {}]
  %s6 = inlined_call_operand.vmem [shape: f32[2,1,64], index: 6, kind: input, shape index: {}]
  %s7 = inlined_call_operand.vmem [shape: bf16[2,64,32], index: 7, kind: input, shape index: {}]
  %s8 = inlined_call_operand.vmem [shape: f32[2,1,32], index: 8, kind: input, shape index: {}]
  %s9 = inlined_call_operand.hbm [shape: f32[2,8,32], index: 9, kind: input, shape index: {}]
  %s10 = inlined_call_operand.hbm [shape: f32[2,8,32], index: 10, kind: input, shape index: {}]
  %s11 = inlined_call_operand.hbm [shape: f32[2,8,32], index: 11, kind: input, shape index: {}]
  %s12 = inlined_call_operand.hbm [shape: f32[2,8,32], index: 12, kind: input, shape index: {}]
  %s13 = inlined_call_operand.hbm [shape: f32[2,8,32], index: 13, kind: output, shape index: {}]
  %s14 = sld [smem:[#allocation0]]
  $region117: #{tpu_custom_call.1} parent=0
    _
  %s16 = ssub.s32 1, %s14
  %s17 = scalar_select 0, %s16, %s14
  $region1: #{tpu_custom_call.1} parent=0
    #allocation3 [shape = 'u8[8192]{0}', space=vmem, size = 0x2000, scoped, tag = 'input window, operand 0']
    #allocation4 [shape = 's32[2]{0}', space=sflag, size = 0x8, scoped, tag = 'scoped memory for tpu_custom_call.1']
    #allocation5 [shape = 's32[2]{0}', space=sflag, size = 0x8, scoped, tag = 'scoped memory for tpu_custom_call.1']
    #allocation6 [shape = 'u8[1024]{0}', space=vmem, size = 0x400, scoped, tag = 'input window, operand 2']
    #allocation7 [shape = 's32[2]{0}', space=sflag, size = 0x8, scoped, tag = 'scoped memory for tpu_custom_call.1']
    #allocation8 [shape = 'u8[8192]{0}', space=vmem, size = 0x2000, scoped, tag = 'input window, operand 9']
    #allocation9 [shape = 'u8[8192]{0}', space=vmem, size = 0x2000, scoped, tag = 'input window, operand 10']
    #allocation10 [shape = 's32[2]{0}', space=sflag, size = 0x8, scoped, tag = 'scoped memory for tpu_custom_call.1']
    #allocation11 [shape = 'u8[8192]{0}', space=vmem, size = 0x2000, scoped, tag = 'input window, operand 11']
    #allocation12 [shape = 'u8[8192]{0}', space=vmem, size = 0x2000, scoped, tag = 'input window, operand 12']
    #allocation13 [shape = 's32[2]{0}', space=sflag, size = 0x8, scoped, tag = 'scoped memory for tpu_custom_call.1']
    #allocation14 [shape = 'u8[8192]{0}', space=vmem, size = 0x2000, scoped, tag = 'output window, operand 0']
    %18 = vsyncpa [#allocation4], 0
    %s19 = scalar_lea.sflag [#allocation4], 1
    %20 = vsyncpa %s19, 0
    %21 = vsyncpa [#allocation7], 0
    %s22 = scalar_lea.sflag [#allocation7], 1
    %23 = vsyncpa %s22, 0
    %24 = vsyncpa [#allocation10], 0
    %s25 = scalar_lea.sflag [#allocation10], 1
    %26 = vsyncpa %s25, 0
    %27 = vsyncpa [#allocation13], 0
    %s28 = scalar_lea.sflag [#allocation13], 1
    %29 = vsyncpa %s28, 0
    %30 = vsyncpa [#allocation5], 0
    %s31 = scalar_lea.sflag [#allocation5], 1
    %32 = vsyncpa %s31, 0
    loop: start=0, step=1, limit=6
    $region2: #{tpu_custom_call.1} parent=1 // loop_pre_header
      _
    $region3: #{tpu_custom_call.1} parent=1 // loop_header
      %s34 = sphi 0, %s38
      %p35 = scmp.ge.s32.totalorder %s34, 6
      %s41 = sphi 0, %s53
      %s42 = sphi 0, %s49
      %s43 = sphi 0, %s41
      %s44 = sphi 0, %s42
      %s45 = sphi 0, %s43
      %s46 = sphi 0, %s44
      %s56 = sphi 0, %s58
      %s59 = sphi 0, %s56
      %s60 = sphi 0, %s59
      %s76 = sphi 0, %s60
      %s82 = sphi 0, %s84
      %s85 = sphi 0, %s82
      %s86 = sphi 0, %s85
      %s102 = sphi 0, %s86
      %s108 = sphi 0, %s110
      %s111 = sphi 0, %s108
      %s112 = sphi 0, %s111
      %s128 = sphi 0, %s112
      %s134 = sphi 0, %s136
      %s137 = sphi 0, %s134
      %s138 = sphi 0, %s137
      %s154 = sphi 0, %s138
      %s160 = sphi 0, %s162
      %s163 = sphi 0, %s160
      %s164 = sphi 0, %s163
      %s180 = sphi 0, %s164
      %s186 = sphi 0, %s188
      %s189 = sphi 0, %s186
      %s190 = sphi 0, %s189
      %s206 = sphi 0, %s190
      %s212 = sphi 0, %s214
      %s215 = sphi 0, %s212
      %s216 = sphi 0, %s215
      %s232 = sphi 0, %s216
      %s238 = sphi 0, %s240
      %s241 = sphi 0, %s238
      %s242 = sphi 0, %s241
      %s258 = sphi 0, %s242
      %s264 = sphi 0, %s266
      %s267 = sphi 0, %s264
      %s268 = sphi 0, %s267
      %s284 = sphi 0, %s268
      %s290 = sphi 0, %s292
      %s293 = sphi 0, %s290
      %s294 = sphi 0, %s293
      %s310 = sphi 0, %s294
      %s316 = sphi 0, %s318
      %s319 = sphi 0, %s316
      %s320 = sphi 0, %s319
      %s336 = sphi 0, %s320
      %s342 = sphi 0, %s344
      %s345 = sphi 0, %s342
      %s346 = sphi 0, %s345
      %s362 = sphi 0, %s346
      %s368 = sphi 0, %s370
      %s371 = sphi 0, %s368
      %s372 = sphi 0, %s371
      %s388 = sphi 0, %s372
      %s394 = sphi 0, %s396
      %s397 = sphi 0, %s394
      %s398 = sphi 0, %s397
      %s414 = sphi 0, %s398
    $region4: #{tpu_custom_call.1} parent=1 // loop_header_branch
      %37 = sbr.rel (%p35) target = $region8
    $region5: #{tpu_custom_call.1} parent=1 // loop_body
      %s39 = ssub.s32 %s34, 1
      %s40 = ssub.s32 %s34, 2
      %s47 = sadd.s32 1, %s42
      %p48 = scmp.ge.s32.totalorder %s47, 2
      %s49 = scalar_select %p48, 0, %s47
      %s50 = sadd.s32 1, %s41
      %s51 = scalar_select %p48, %s50, %s41
      %p52 = scmp.ge.s32.totalorder %s51, 2
      %s53 = scalar_select %p52, 0, %s51
      %s54 = ssub.s32 %s41, %s53
      %p55 = scmp.eq.s32.totalorder %s54, 0
      %s57 = sadd.s32 %s56, 1
      %s58 = scalar_select %p55, %s56, %s57
      %p61 = pneg %p55
      %p62 = scmp.eq.s32.totalorder %s34, 3
      %p63 = por %p61, %p62
      %p64 = scmp.ne.s32.totalorder %s56, %s59
      %p65 = scmp.eq.s32.totalorder %s34, 0
      %p66 = por %p64, %p65
      %p67 = scmp.ne.s32.totalorder %s56, %s59
      %p68 = scmp.eq.s32.totalorder %s39, 3
      %p69 = por %p67, %p68
      %p70 = scmp.ne.s32.totalorder %s59, %s60
      %p71 = scmp.eq.s32.totalorder %s39, 0
      %p72 = por %p70, %p71
      %p73 = scmp.ne.s32.totalorder %s59, %s60
      %p74 = scmp.eq.s32.totalorder %s40, 3
      %p75 = por %p73, %p74
      %p77 = scmp.ne.s32.totalorder %s60, %s76
      %p78 = scmp.eq.s32.totalorder %s40, 0
      %p79 = por %p77, %p78
      %s80 = ssub.s32 %s42, %s49
      %p81 = scmp.eq.s32.totalorder %s80, 0
      %s83 = sadd.s32 %s82, 1
      %s84 = scalar_select %p81, %s82, %s83
      %p87 = pneg %p81
      %p88 = scmp.eq.s32.totalorder %s34, 3
      %p89 = por %p87, %p88
      %p90 = scmp.ne.s32.totalorder %s82, %s85
      %p91 = scmp.eq.s32.totalorder %s34, 0
      %p92 = por %p90, %p91
      %p93 = scmp.ne.s32.totalorder %s82, %s85
      %p94 = scmp.eq.s32.totalorder %s39, 3
      %p95 = por %p93, %p94
      %p96 = scmp.ne.s32.totalorder %s85, %s86
      %p97 = scmp.eq.s32.totalorder %s39, 0
      %p98 = por %p96, %p97
      %p99 = scmp.ne.s32.totalorder %s85, %s86
      %p100 = scmp.eq.s32.totalorder %s40, 3
      %p101 = por %p99, %p100
      %p103 = scmp.ne.s32.totalorder %s86, %s102
      %p104 = scmp.eq.s32.totalorder %s40, 0
      %p105 = por %p103, %p104
      %s106 = ssub.s32 %s42, %s49
      %p107 = scmp.eq.s32.totalorder %s106, 0
      %s109 = sadd.s32 %s108, 1
      %s110 = scalar_select %p107, %s108, %s109
      %p113 = pneg %p107
      %p114 = scmp.eq.s32.totalorder %s34, 3
      %p115 = por %p113, %p114
      %p116 = scmp.ne.s32.totalorder %s108, %s111
      %p117 = scmp.eq.s32.totalorder %s34, 0
      %p118 = por %p116, %p117
      %p119 = scmp.ne.s32.totalorder %s108, %s111
      %p120 = scmp.eq.s32.totalorder %s39, 3
      %p121 = por %p119, %p120
      %p122 = scmp.ne.s32.totalorder %s111, %s112
      %p123 = scmp.eq.s32.totalorder %s39, 0
      %p124 = por %p122, %p123
      %p125 = scmp.ne.s32.totalorder %s111, %s112
      %p126 = scmp.eq.s32.totalorder %s40, 3
      %p127 = por %p125, %p126
      %p129 = scmp.ne.s32.totalorder %s112, %s128
      %p130 = scmp.eq.s32.totalorder %s40, 0
      %p131 = por %p129, %p130
      %s132 = ssub.s32 %s42, %s49
      %p133 = scmp.eq.s32.totalorder %s132, 0
      %s135 = sadd.s32 %s134, 1
      %s136 = scalar_select %p133, %s134, %s135
      %p139 = pneg %p133
      %p140 = scmp.eq.s32.totalorder %s34, 3
      %p141 = por %p139, %p140
      %p142 = scmp.ne.s32.totalorder %s134, %s137
      %p143 = scmp.eq.s32.totalorder %s34, 0
      %p144 = por %p142, %p143
      %p145 = scmp.ne.s32.totalorder %s134, %s137
      %p146 = scmp.eq.s32.totalorder %s39, 3
      %p147 = por %p145, %p146
      %p148 = scmp.ne.s32.totalorder %s137, %s138
      %p149 = scmp.eq.s32.totalorder %s39, 0
      %p150 = por %p148, %p149
      %p151 = scmp.ne.s32.totalorder %s137, %s138
      %p152 = scmp.eq.s32.totalorder %s40, 3
      %p153 = por %p151, %p152
      %p155 = scmp.ne.s32.totalorder %s138, %s154
      %p156 = scmp.eq.s32.totalorder %s40, 0
      %p157 = por %p155, %p156
      %s158 = ssub.s32 %s42, %s49
      %p159 = scmp.eq.s32.totalorder %s158, 0
      %s161 = sadd.s32 %s160, 1
      %s162 = scalar_select %p159, %s160, %s161
      %p165 = pneg %p159
      %p166 = scmp.eq.s32.totalorder %s34, 3
      %p167 = por %p165, %p166
      %p168 = scmp.ne.s32.totalorder %s160, %s163
      %p169 = scmp.eq.s32.totalorder %s34, 0
      %p170 = por %p168, %p169
      %p171 = scmp.ne.s32.totalorder %s160, %s163
      %p172 = scmp.eq.s32.totalorder %s39, 3
      %p173 = por %p171, %p172
      %p174 = scmp.ne.s32.totalorder %s163, %s164
      %p175 = scmp.eq.s32.totalorder %s39, 0
      %p176 = por %p174, %p175
      %p177 = scmp.ne.s32.totalorder %s163, %s164
      %p178 = scmp.eq.s32.totalorder %s40, 3
      %p179 = por %p177, %p178
      %p181 = scmp.ne.s32.totalorder %s164, %s180
      %p182 = scmp.eq.s32.totalorder %s40, 0
      %p183 = por %p181, %p182
      %s184 = ssub.s32 %s42, %s49
      %p185 = scmp.eq.s32.totalorder %s184, 0
      %s187 = sadd.s32 %s186, 1
      %s188 = scalar_select %p185, %s186, %s187
      %p191 = pneg %p185
      %p192 = scmp.eq.s32.totalorder %s34, 3
      %p193 = por %p191, %p192
      %p194 = scmp.ne.s32.totalorder %s186, %s189
      %p195 = scmp.eq.s32.totalorder %s34, 0
      %p196 = por %p194, %p195
      %p197 = scmp.ne.s32.totalorder %s186, %s189
      %p198 = scmp.eq.s32.totalorder %s39, 3
      %p199 = por %p197, %p198
      %p200 = scmp.ne.s32.totalorder %s189, %s190
      %p201 = scmp.eq.s32.totalorder %s39, 0
      %p202 = por %p200, %p201
      %p203 = scmp.ne.s32.totalorder %s189, %s190
      %p204 = scmp.eq.s32.totalorder %s40, 3
      %p205 = por %p203, %p204
      %p207 = scmp.ne.s32.totalorder %s190, %s206
      %p208 = scmp.eq.s32.totalorder %s40, 0
      %p209 = por %p207, %p208
      %s210 = ssub.s32 %s42, %s49
      %p211 = scmp.eq.s32.totalorder %s210, 0
      %s213 = sadd.s32 %s212, 1
      %s214 = scalar_select %p211, %s212, %s213
      %p217 = pneg %p211
      %p218 = scmp.eq.s32.totalorder %s34, 3
      %p219 = por %p217, %p218
      %p220 = scmp.ne.s32.totalorder %s212, %s215
      %p221 = scmp.eq.s32.totalorder %s34, 0
      %p222 = por %p220, %p221
      %p223 = scmp.ne.s32.totalorder %s212, %s215
      %p224 = scmp.eq.s32.totalorder %s39, 3
      %p225 = por %p223, %p224
      %p226 = scmp.ne.s32.totalorder %s215, %s216
      %p227 = scmp.eq.s32.totalorder %s39, 0
      %p228 = por %p226, %p227
      %p229 = scmp.ne.s32.totalorder %s215, %s216
      %p230 = scmp.eq.s32.totalorder %s40, 3
      %p231 = por %p229, %p230
      %p233 = scmp.ne.s32.totalorder %s216, %s232
      %p234 = scmp.eq.s32.totalorder %s40, 0
      %p235 = por %p233, %p234
      %s236 = ssub.s32 %s42, %s49
      %p237 = scmp.eq.s32.totalorder %s236, 0
      %s239 = sadd.s32 %s238, 1
      %s240 = scalar_select %p237, %s238, %s239
      %p243 = pneg %p237
      %p244 = scmp.eq.s32.totalorder %s34, 3
      %p245 = por %p243, %p244
      %p246 = scmp.ne.s32.totalorder %s238, %s241
      %p247 = scmp.eq.s32.totalorder %s34, 0
      %p248 = por %p246, %p247
      %p249 = scmp.ne.s32.totalorder %s238, %s241
      %p250 = scmp.eq.s32.totalorder %s39, 3
      %p251 = por %p249, %p250
      %p252 = scmp.ne.s32.totalorder %s241, %s242
      %p253 = scmp.eq.s32.totalorder %s39, 0
      %p254 = por %p252, %p253
      %p255 = scmp.ne.s32.totalorder %s241, %s242
      %p256 = scmp.eq.s32.totalorder %s40, 3
      %p257 = por %p255, %p256
      %p259 = scmp.ne.s32.totalorder %s242, %s258
      %p260 = scmp.eq.s32.totalorder %s40, 0
      %p261 = por %p259, %p260
      %s262 = ssub.s32 %s42, %s49
      %p263 = scmp.eq.s32.totalorder %s262, 0
      %s265 = sadd.s32 %s264, 1
      %s266 = scalar_select %p263, %s264, %s265
      %p269 = pneg %p263
      %p270 = scmp.eq.s32.totalorder %s34, 3
      %p271 = por %p269, %p270
      %p272 = scmp.ne.s32.totalorder %s264, %s267
      %p273 = scmp.eq.s32.totalorder %s34, 0
      %p274 = por %p272, %p273
      %p275 = scmp.ne.s32.totalorder %s264, %s267
      %p276 = scmp.eq.s32.totalorder %s39, 3
      %p277 = por %p275, %p276
      %p278 = scmp.ne.s32.totalorder %s267, %s268
      %p279 = scmp.eq.s32.totalorder %s39, 0
      %p280 = por %p278, %p279
      %p281 = scmp.ne.s32.totalorder %s267, %s268
      %p282 = scmp.eq.s32.totalorder %s40, 3
      %p283 = por %p281, %p282
      %p285 = scmp.ne.s32.totalorder %s268, %s284
      %p286 = scmp.eq.s32.totalorder %s40, 0
      %p287 = por %p285, %p286
      %s288 = ssub.s32 %s42, %s49
      %p289 = scmp.eq.s32.totalorder %s288, 0
      %s291 = sadd.s32 %s290, 1
      %s292 = scalar_select %p289, %s290, %s291
      %p295 = pneg %p289
      %p296 = scmp.eq.s32.totalorder %s34, 3
      %p297 = por %p295, %p296
      %p298 = scmp.ne.s32.totalorder %s290, %s293
      %p299 = scmp.eq.s32.totalorder %s34, 0
      %p300 = por %p298, %p299
      %p301 = scmp.ne.s32.totalorder %s290, %s293
      %p302 = scmp.eq.s32.totalorder %s39, 3
      %p303 = por %p301, %p302
      %p304 = scmp.ne.s32.totalorder %s293, %s294
      %p305 = scmp.eq.s32.totalorder %s39, 0
      %p306 = por %p304, %p305
      %p307 = scmp.ne.s32.totalorder %s293, %s294
      %p308 = scmp.eq.s32.totalorder %s40, 3
      %p309 = por %p307, %p308
      %p311 = scmp.ne.s32.totalorder %s294, %s310
      %p312 = scmp.eq.s32.totalorder %s40, 0
      %p313 = por %p311, %p312
      %s314 = ssub.s32 %s42, %s49
      %p315 = scmp.eq.s32.totalorder %s314, 0
      %s317 = sadd.s32 %s316, 1
      %s318 = scalar_select %p315, %s316, %s317
      %p321 = pneg %p315
      %p322 = scmp.eq.s32.totalorder %s34, 3
      %p323 = por %p321, %p322
      %p324 = scmp.ne.s32.totalorder %s316, %s319
      %p325 = scmp.eq.s32.totalorder %s34, 0
      %p326 = por %p324, %p325
      %p327 = scmp.ne.s32.totalorder %s316, %s319
      %p328 = scmp.eq.s32.totalorder %s39, 3
      %p329 = por %p327, %p328
      %p330 = scmp.ne.s32.totalorder %s319, %s320
      %p331 = scmp.eq.s32.totalorder %s39, 0
      %p332 = por %p330, %p331
      %p333 = scmp.ne.s32.totalorder %s319, %s320
      %p334 = scmp.eq.s32.totalorder %s40, 3
      %p335 = por %p333, %p334
      %p337 = scmp.ne.s32.totalorder %s320, %s336
      %p338 = scmp.eq.s32.totalorder %s40, 0
      %p339 = por %p337, %p338
      %s340 = ssub.s32 %s42, %s49
      %p341 = scmp.eq.s32.totalorder %s340, 0
      %s343 = sadd.s32 %s342, 1
      %s344 = scalar_select %p341, %s342, %s343
      %p347 = pneg %p341
      %p348 = scmp.eq.s32.totalorder %s34, 3
      %p349 = por %p347, %p348
      %p350 = scmp.ne.s32.totalorder %s342, %s345
      %p351 = scmp.eq.s32.totalorder %s34, 0
      %p352 = por %p350, %p351
      %p353 = scmp.ne.s32.totalorder %s342, %s345
      %p354 = scmp.eq.s32.totalorder %s39, 3
      %p355 = por %p353, %p354
      %p356 = scmp.ne.s32.totalorder %s345, %s346
      %p357 = scmp.eq.s32.totalorder %s39, 0
      %p358 = por %p356, %p357
      %p359 = scmp.ne.s32.totalorder %s345, %s346
      %p360 = scmp.eq.s32.totalorder %s40, 3
      %p361 = por %p359, %p360
      %p363 = scmp.ne.s32.totalorder %s346, %s362
      %p364 = scmp.eq.s32.totalorder %s40, 0
      %p365 = por %p363, %p364
      %s366 = ssub.s32 %s42, %s49
      %p367 = scmp.eq.s32.totalorder %s366, 0
      %s369 = sadd.s32 %s368, 1
      %s370 = scalar_select %p367, %s368, %s369
      %p373 = pneg %p367
      %p374 = scmp.eq.s32.totalorder %s34, 3
      %p375 = por %p373, %p374
      %p376 = scmp.ne.s32.totalorder %s368, %s371
      %p377 = scmp.eq.s32.totalorder %s34, 0
      %p378 = por %p376, %p377
      %p379 = scmp.ne.s32.totalorder %s368, %s371
      %p380 = scmp.eq.s32.totalorder %s39, 3
      %p381 = por %p379, %p380
      %p382 = scmp.ne.s32.totalorder %s371, %s372
      %p383 = scmp.eq.s32.totalorder %s39, 0
      %p384 = por %p382, %p383
      %p385 = scmp.ne.s32.totalorder %s371, %s372
      %p386 = scmp.eq.s32.totalorder %s40, 3
      %p387 = por %p385, %p386
      %p389 = scmp.ne.s32.totalorder %s372, %s388
      %p390 = scmp.eq.s32.totalorder %s40, 0
      %p391 = por %p389, %p390
      %s392 = ssub.s32 %s41, %s53
      %p393 = scmp.eq.s32.totalorder %s392, 0
      %s395 = sadd.s32 %s394, 1
      %s396 = scalar_select %p393, %s394, %s395
      %p399 = pneg %p393
      %p400 = scmp.eq.s32.totalorder %s34, 3
      %p401 = por %p399, %p400
      %p402 = scmp.ne.s32.totalorder %s394, %s397
      %p403 = scmp.eq.s32.totalorder %s34, 0
      %p404 = por %p402, %p403
      %p405 = scmp.ne.s32.totalorder %s394, %s397
      %p406 = scmp.eq.s32.totalorder %s39, 3
      %p407 = por %p405, %p406
      %p408 = scmp.ne.s32.totalorder %s397, %s398
      %p409 = scmp.eq.s32.totalorder %s39, 0
      %p410 = por %p408, %p409
      %p411 = scmp.ne.s32.totalorder %s397, %s398
      %p412 = scmp.eq.s32.totalorder %s40, 3
      %p413 = por %p411, %p412
      %p415 = scmp.ne.s32.totalorder %s398, %s414
      %p416 = scmp.eq.s32.totalorder %s40, 0
      %p417 = por %p415, %p416
      %p418 = scmp.le.s32.totalorder 1, %s34
      %p419 = scmp.lt.s32.totalorder %s34, 5
      %p420 = pnand %p418, %p419
      %p421 = pneg %p420
      // Predicated region
      $region9: #{tpu_custom_call.1} parent=5 // pred_check
        _
      $region10: #{tpu_custom_call.1} parent=5 // pred_check_branch
        %423 = sbr.rel (%p420) target = $region12
      $region11: #{tpu_custom_call.1} parent=5 // pred_region
        %s424 = ssub.s32 %s34, 1
      $region12: #{tpu_custom_call.1} parent=5 // pred_fallthru
        _
      %p425 = scmp.lt.s32.totalorder %s34, 4
      // Predicated region
      $region13: #{tpu_custom_call.1} parent=5 // pred_check
        %p426 = pneg %p425
      $region14: #{tpu_custom_call.1} parent=5 // pred_check_branch
        %428 = sbr.rel (%p426) target = $region16
      $region15: #{tpu_custom_call.1} parent=5 // pred_region
        // Predicated region
        $region17: #{tpu_custom_call.1} parent=15 // pred_check
          %p429 = pneg %p66
        $region18: #{tpu_custom_call.1} parent=15 // pred_check_branch
          %431 = sbr.rel (%p429) target = $region20
        $region19: #{tpu_custom_call.1} parent=15 // pred_region
          %s432 = sand.u32 %s56, 1
          %s433 = scalar_lea.sflag [#allocation4], %s432
          %s434 = sand.u32 %s56, 1
          %s435 = smul.addr %s434, 8
          %s436 = scalar_lea.vmem [#allocation3], %s435
          %438 = vsyncadd %s433, 0
          %s439 = smul.addr %s41, 8
          %s440 = scalar_lea.hbm %s0, %s439
          %s442 = sshll.u32 %s440, 4
          %s443 = int_to_ptr.hbm [resolvable:$true] %s442
          %s444 = sshll.u32 %s436, 4
          %s445 = int_to_ptr.vmem [resolvable:$true] %s444
          %447 = dma.hbm_to_vmem [thread:$0]  %s443, 128, %s445, %s433
        $region20: #{tpu_custom_call.1} parent=15 // pred_fallthru
          _
        // Predicated region
        $region21: #{tpu_custom_call.1} parent=15 // pred_check
          %p448 = pneg %p92
        $region22: #{tpu_custom_call.1} parent=15 // pred_check_branch
          %450 = sbr.rel (%p448) target = $region24
        $region23: #{tpu_custom_call.1} parent=15 // pred_region
          %p451 = scmp.lt.s32.totalorder %s42, 1
          %s452 = scalar_select %p451, %s42, 1
          %s453 = smul.addr %s452, 4
          %s454 = smul.addr %s453, 4
          %s455 = scalar_lea.vmem %s1, %s454
        $region24: #{tpu_custom_call.1} parent=15 // pred_fallthru
          _
        // Predicated region
        $region25: #{tpu_custom_call.1} parent=15 // pred_check
          %p456 = pneg %p118
        $region26: #{tpu_custom_call.1} parent=15 // pred_check_branch
          %458 = sbr.rel (%p456) target = $region28
        $region27: #{tpu_custom_call.1} parent=15 // pred_region
          %s459 = sand.u32 %s34, 1
          %s460 = scalar_lea.sflag [#allocation7], %s459
          %s461 = sand.u32 %s108, 1
          %s462 = scalar_lea.vmem [#allocation6], %s461
          %464 = vsyncadd %s460, 0
          %s465 = scalar_lea.hbm %s2, %s42
          %s467 = sshll.u32 %s465, 4
          %s468 = int_to_ptr.hbm [resolvable:$true] %s467
          %s469 = sshll.u32 %s462, 4
          %s470 = int_to_ptr.vmem [resolvable:$true] %s469
          %472 = dma.hbm_to_vmem [thread:$0]  %s468, 16, %s470, %s460
        $region28: #{tpu_custom_call.1} parent=15 // pred_fallthru
          _
        // Predicated region
        $region29: #{tpu_custom_call.1} parent=15 // pred_check
          %p473 = pneg %p144
        $region30: #{tpu_custom_call.1} parent=15 // pred_check_branch
          %475 = sbr.rel (%p473) target = $region32
        $region31: #{tpu_custom_call.1} parent=15 // pred_region
          %p476 = scmp.lt.s32.totalorder %s42, 1
          %s477 = scalar_select %p476, %s42, 1
          %s478 = smul.addr %s477, 4
          %s479 = smul.addr %s478, 4
          %s480 = scalar_lea.vmem %s3, %s479
        $region32: #{tpu_custom_call.1} parent=15 // pred_fallthru
          _
        // Predicated region
        $region33: #{tpu_custom_call.1} parent=15 // pred_check
          %p481 = pneg %p170
        $region34: #{tpu_custom_call.1} parent=15 // pred_check_branch
          %483 = sbr.rel (%p481) target = $region36
        $region35: #{tpu_custom_call.1} parent=15 // pred_region
          %p484 = scmp.lt.s32.totalorder %s42, 1
          %s485 = scalar_select %p484, %s42, 1
          %s486 = scalar_lea.vmem %s4, %s485
        $region36: #{tpu_custom_call.1} parent=15 // pred_fallthru
          _
        // Predicated region
        $region37: #{tpu_custom_call.1} parent=15 // pred_check
          %p487 = pneg %p196
        $region38: #{tpu_custom_call.1} parent=15 // pred_check_branch
          %489 = sbr.rel (%p487) target = $region40
        $region39: #{tpu_custom_call.1} parent=15 // pred_region
          %p490 = scmp.lt.s32.totalorder %s42, 1
          %s491 = scalar_select %p490, %s42, 1
          %s492 = smul.addr %s491, 4
          %s493 = smul.addr %s492, 4
          %s494 = scalar_lea.vmem %s5, %s493
        $region40: #{tpu_custom_call.1} parent=15 // pred_fallthru
          _
        // Predicated region
        $region41: #{tpu_custom_call.1} parent=15 // pred_check
          %p495 = pneg %p222
        $region42: #{tpu_custom_call.1} parent=15 // pred_check_branch
          %497 = sbr.rel (%p495) target = $region44
        $region43: #{tpu_custom_call.1} parent=15 // pred_region
          %p498 = scmp.lt.s32.totalorder %s42, 1
          %s499 = scalar_select %p498, %s42, 1
          %s500 = scalar_lea.vmem %s6, %s499
        $region44: #{tpu_custom_call.1} parent=15 // pred_fallthru
          _
        // Predicated region
        $region45: #{tpu_custom_call.1} parent=15 // pred_check
          %p501 = pneg %p248
        $region46: #{tpu_custom_call.1} parent=15 // pred_check_branch
          %503 = sbr.rel (%p501) target = $region48
        $region47: #{tpu_custom_call.1} parent=15 // pred_region
          %p504 = scmp.lt.s32.totalorder %s42, 1
          %s505 = scalar_select %p504, %s42, 1
          %s506 = smul.addr %s505, 8
          %s507 = smul.addr %s506, 4
          %s508 = scalar_lea.vmem %s7, %s507
        $region48: #{tpu_custom_call.1} parent=15 // pred_fallthru
          _
        // Predicated region
        $region49: #{tpu_custom_call.1} parent=15 // pred_check
          %p509 = pneg %p274
        $region50: #{tpu_custom_call.1} parent=15 // pred_check_branch
          %511 = sbr.rel (%p509) target = $region52
        $region51: #{tpu_custom_call.1} parent=15 // pred_region
          %p512 = scmp.lt.s32.totalorder %s42, 1
          %s513 = scalar_select %p512, %s42, 1
          %s514 = scalar_lea.vmem %s8, %s513
        $region52: #{tpu_custom_call.1} parent=15 // pred_fallthru
          _
        // Predicated region
        $region53: #{tpu_custom_call.1} parent=15 // pred_check
          %p515 = pneg %p300
        $region54: #{tpu_custom_call.1} parent=15 // pred_check_branch
          %517 = sbr.rel (%p515) target = $region56
        $region55: #{tpu_custom_call.1} parent=15 // pred_region
          %s518 = sand.u32 %s34, 1
          %s519 = scalar_lea.sflag [#allocation7], %s518
          %s520 = sand.u32 %s290, 1
          %s521 = smul.addr %s520, 8
          %s522 = scalar_lea.vmem [#allocation8], %s521
          %524 = vsyncadd %s519, 0
          %s525 = smul.addr %s42, 8
          %s526 = scalar_lea.hbm %s9, %s525
          %s528 = sshll.u32 %s526, 4
          %s529 = int_to_ptr.hbm [resolvable:$true] %s528
          %s530 = sshll.u32 %s522, 4
          %s531 = int_to_ptr.vmem [resolvable:$true] %s530
          %533 = dma.hbm_to_vmem [thread:$0]  %s529, 128, %s531, %s519
        $region56: #{tpu_custom_call.1} parent=15 // pred_fallthru
          _
        // Predicated region
        $region57: #{tpu_custom_call.1} parent=15 // pred_check
          %p534 = pneg %p326
        $region58: #{tpu_custom_call.1} parent=15 // pred_check_branch
          %536 = sbr.rel (%p534) target = $region60
        $region59: #{tpu_custom_call.1} parent=15 // pred_region
          %s537 = sand.u32 %s34, 1
          %s538 = scalar_lea.sflag [#allocation10], %s537
          %s539 = sand.u32 %s316, 1
          %s540 = smul.addr %s539, 8
          %s541 = scalar_lea.vmem [#allocation9], %s540
          %543 = vsyncadd %s538, 0
          %s544 = smul.addr %s42, 8
          %s545 = scalar_lea.hbm %s10, %s544
          %s547 = sshll.u32 %s545, 4
          %s548 = int_to_ptr.hbm [resolvable:$true] %s547
          %s549 = sshll.u32 %s541, 4
          %s550 = int_to_ptr.vmem [resolvable:$true] %s549
          %552 = dma.hbm_to_vmem [thread:$0]  %s548, 128, %s550, %s538
        $region60: #{tpu_custom_call.1} parent=15 // pred_fallthru
          _
        // Predicated region
        $region61: #{tpu_custom_call.1} parent=15 // pred_check
          %p553 = pneg %p352
        $region62: #{tpu_custom_call.1} parent=15 // pred_check_branch
          %555 = sbr.rel (%p553) target = $region64
        $region63: #{tpu_custom_call.1} parent=15 // pred_region
          %s556 = sand.u32 %s34, 1
          %s557 = scalar_lea.sflag [#allocation10], %s556
          %s558 = sand.u32 %s342, 1
          %s559 = smul.addr %s558, 8
          %s560 = scalar_lea.vmem [#allocation11], %s559
          %562 = vsyncadd %s557, 0
          %s563 = smul.addr %s42, 8
          %s564 = scalar_lea.hbm %s11, %s563
          %s566 = sshll.u32 %s564, 4
          %s567 = int_to_ptr.hbm [resolvable:$true] %s566
          %s568 = sshll.u32 %s560, 4
          %s569 = int_to_ptr.vmem [resolvable:$true] %s568
          %571 = dma.hbm_to_vmem [thread:$0]  %s567, 128, %s569, %s557
        $region64: #{tpu_custom_call.1} parent=15 // pred_fallthru
          _
        // Predicated region
        $region65: #{tpu_custom_call.1} parent=15 // pred_check
          %p572 = pneg %p378
        $region66: #{tpu_custom_call.1} parent=15 // pred_check_branch
          %574 = sbr.rel (%p572) target = $region68
        $region67: #{tpu_custom_call.1} parent=15 // pred_region
          %s575 = sand.u32 %s368, 1
          %s576 = scalar_lea.sflag [#allocation13], %s575
          %s577 = sand.u32 %s368, 1
          %s578 = smul.addr %s577, 8
          %s579 = scalar_lea.vmem [#allocation12], %s578
          %581 = vsyncadd %s576, 0
          %s582 = smul.addr %s42, 8
          %s583 = scalar_lea.hbm %s12, %s582
          %s585 = sshll.u32 %s583, 4
          %s586 = int_to_ptr.hbm [resolvable:$true] %s585
          %s587 = sshll.u32 %s579, 4
          %s588 = int_to_ptr.vmem [resolvable:$true] %s587
          %590 = dma.hbm_to_vmem [thread:$0]  %s586, 128, %s588, %s576
        $region68: #{tpu_custom_call.1} parent=15 // pred_fallthru
          _
      $region16: #{tpu_custom_call.1} parent=5 // pred_fallthru
        _
      %p591 = scmp.le.s32.totalorder 1, %s34
      %p592 = scmp.lt.s32.totalorder %s34, 5
      %p593 = pnand %p591, %p592
      %p594 = pneg %p593
      // Predicated region
      $region69: #{tpu_custom_call.1} parent=5 // pred_check
        _
      $region70: #{tpu_custom_call.1} parent=5 // pred_check_branch
        %596 = sbr.rel (%p593) target = $region72
      $region71: #{tpu_custom_call.1} parent=5 // pred_region
        %s597 = ssub.s32 %s34, 1
        %s598 = sand.u32 %s59, 1
        %s599 = scalar_lea.sflag [#allocation4], %s598
        %s600 = sand.u32 %s59, 1
        %s601 = smul.addr %s600, 8
        %s602 = scalar_lea.vmem [#allocation3], %s601
        // Predicated region
        $region73: #{tpu_custom_call.1} parent=71 // pred_check
          %p603 = pneg %p72
        $region74: #{tpu_custom_call.1} parent=71 // pred_check_branch
          %605 = sbr.rel (%p603) target = $region76
        $region75: #{tpu_custom_call.1} parent=71 // pred_region
          %607 = dma.done %s599, 128
        $region76: #{tpu_custom_call.1} parent=71 // pred_fallthru
          _
        %s608 = sand.u32 %s39, 1
        %s609 = scalar_lea.sflag [#allocation7], %s608
        %s610 = sand.u32 %s111, 1
        %s611 = scalar_lea.vmem [#allocation6], %s610
        // Predicated region
        $region77: #{tpu_custom_call.1} parent=71 // pred_check
          %p612 = pneg %p124
        $region78: #{tpu_custom_call.1} parent=71 // pred_check_branch
          %614 = sbr.rel (%p612) target = $region80
        $region79: #{tpu_custom_call.1} parent=71 // pred_region
          %616 = dma.done %s609, 16
        $region80: #{tpu_custom_call.1} parent=71 // pred_fallthru
          _
        %s617 = sand.u32 %s39, 1
        %s618 = scalar_lea.sflag [#allocation7], %s617
        %s619 = sand.u32 %s293, 1
        %s620 = smul.addr %s619, 8
        %s621 = scalar_lea.vmem [#allocation8], %s620
        // Predicated region
        $region81: #{tpu_custom_call.1} parent=71 // pred_check
          %p622 = pneg %p306
        $region82: #{tpu_custom_call.1} parent=71 // pred_check_branch
          %624 = sbr.rel (%p622) target = $region84
        $region83: #{tpu_custom_call.1} parent=71 // pred_region
          %626 = dma.done %s618, 128
        $region84: #{tpu_custom_call.1} parent=71 // pred_fallthru
          _
        %s627 = sand.u32 %s39, 1
        %s628 = scalar_lea.sflag [#allocation10], %s627
        %s629 = sand.u32 %s319, 1
        %s630 = smul.addr %s629, 8
        %s631 = scalar_lea.vmem [#allocation9], %s630
        // Predicated region
        $region85: #{tpu_custom_call.1} parent=71 // pred_check
          %p632 = pneg %p332
        $region86: #{tpu_custom_call.1} parent=71 // pred_check_branch
          %634 = sbr.rel (%p632) target = $region88
        $region87: #{tpu_custom_call.1} parent=71 // pred_region
          %636 = dma.done %s628, 128
        $region88: #{tpu_custom_call.1} parent=71 // pred_fallthru
          _
        %s637 = sand.u32 %s39, 1
        %s638 = scalar_lea.sflag [#allocation10], %s637
        %s639 = sand.u32 %s345, 1
        %s640 = smul.addr %s639, 8
        %s641 = scalar_lea.vmem [#allocation11], %s640
        // Predicated region
        $region89: #{tpu_custom_call.1} parent=71 // pred_check
          %p642 = pneg %p358
        $region90: #{tpu_custom_call.1} parent=71 // pred_check_branch
          %644 = sbr.rel (%p642) target = $region92
        $region91: #{tpu_custom_call.1} parent=71 // pred_region
          %646 = dma.done %s638, 128
        $region92: #{tpu_custom_call.1} parent=71 // pred_fallthru
          _
        %s647 = sand.u32 %s371, 1
        %s648 = scalar_lea.sflag [#allocation13], %s647
        %s649 = sand.u32 %s371, 1
        %s650 = smul.addr %s649, 8
        %s651 = scalar_lea.vmem [#allocation12], %s650
        // Predicated region
        $region93: #{tpu_custom_call.1} parent=71 // pred_check
          %p652 = pneg %p384
        $region94: #{tpu_custom_call.1} parent=71 // pred_check_branch
          %654 = sbr.rel (%p652) target = $region96
        $region95: #{tpu_custom_call.1} parent=71 // pred_region
          %656 = dma.done %s648, 128
        $region96: #{tpu_custom_call.1} parent=71 // pred_fallthru
          _
        %s657 = sand.u32 %s59, 1
        %s658 = scalar_lea.sflag [#allocation4], %s657
        %s659 = sand.u32 %s59, 1
        %s660 = smul.addr %s659, 8
        %s661 = scalar_lea.vmem [#allocation3], %s660
        %p662 = pneg %p72
        %p663 = pneg %p69
        %p664 = scmp.lt.s32.totalorder %s44, 1
        %s665 = scalar_select %p664, %s44, 1
        %s666 = smul.addr %s665, 4
        %s667 = smul.addr %s666, 4
        %s668 = scalar_lea.vmem %s1, %s667
        %p669 = pneg %p98
        %p670 = pneg %p95
        %s671 = sand.u32 %s39, 1
        %s672 = scalar_lea.sflag [#allocation7], %s671
        %s673 = sand.u32 %s111, 1
        %s674 = scalar_lea.vmem [#allocation6], %s673
        %p675 = pneg %p124
        %p676 = pneg %p121
        %p677 = scmp.lt.s32.totalorder %s44, 1
        %s678 = scalar_select %p677, %s44, 1
        %s679 = smul.addr %s678, 4
        %s680 = smul.addr %s679, 4
        %s681 = scalar_lea.vmem %s3, %s680
        %p682 = pneg %p150
        %p683 = pneg %p147
        %p684 = scmp.lt.s32.totalorder %s44, 1
        %s685 = scalar_select %p684, %s44, 1
        %s686 = scalar_lea.vmem %s4, %s685
        %p687 = pneg %p176
        %p688 = pneg %p173
        %p689 = scmp.lt.s32.totalorder %s44, 1
        %s690 = scalar_select %p689, %s44, 1
        %s691 = smul.addr %s690, 4
        %s692 = smul.addr %s691, 4
        %s693 = scalar_lea.vmem %s5, %s692
        %p694 = pneg %p202
        %p695 = pneg %p199
        %p696 = scmp.lt.s32.totalorder %s44, 1
        %s697 = scalar_select %p696, %s44, 1
        %s698 = scalar_lea.vmem %s6, %s697
        %p699 = pneg %p228
        %p700 = pneg %p225
        %p701 = scmp.lt.s32.totalorder %s44, 1
        %s702 = scalar_select %p701, %s44, 1
        %s703 = smul.addr %s702, 8
        %s704 = smul.addr %s703, 4
        %s705 = scalar_lea.vmem %s7, %s704
        %p706 = pneg %p254
        %p707 = pneg %p251
        %p708 = scmp.lt.s32.totalorder %s44, 1
        %s709 = scalar_select %p708, %s44, 1
        %s710 = scalar_lea.vmem %s8, %s709
        %p711 = pneg %p280
        %p712 = pneg %p277
        %s713 = sand.u32 %s39, 1
        %s714 = scalar_lea.sflag [#allocation7], %s713
        %s715 = sand.u32 %s293, 1
        %s716 = smul.addr %s715, 8
        %s717 = scalar_lea.vmem [#allocation8], %s716
        %p718 = pneg %p306
        %p719 = pneg %p303
        %s720 = sand.u32 %s39, 1
        %s721 = scalar_lea.sflag [#allocation10], %s720
        %s722 = sand.u32 %s319, 1
        %s723 = smul.addr %s722, 8
        %s724 = scalar_lea.vmem [#allocation9], %s723
        %p725 = pneg %p332
        %p726 = pneg %p329
        %s727 = sand.u32 %s39, 1
        %s728 = scalar_lea.sflag [#allocation10], %s727
        %s729 = sand.u32 %s345, 1
        %s730 = smul.addr %s729, 8
        %s731 = scalar_lea.vmem [#allocation11], %s730
        %p732 = pneg %p358
        %p733 = pneg %p355
        %s734 = sand.u32 %s371, 1
        %s735 = scalar_lea.sflag [#allocation13], %s734
        %s736 = sand.u32 %s371, 1
        %s737 = smul.addr %s736, 8
        %s738 = scalar_lea.vmem [#allocation12], %s737
        %p739 = pneg %p384
        %p740 = pneg %p381
        %p741 = pneg %p410
        %p742 = pneg %p407
        %s743 = sand.u32 %s397, 1
        %s744 = scalar_lea.sflag [#allocation5], %s743
        %s745 = sand.u32 %s397, 1
        %s746 = smul.addr %s745, 8
        %s747 = scalar_lea.vmem [#allocation14], %s746
        %p748 = scmp.lt.s32.totalorder %s44, 1
        %s749 = scalar_select %p748, %s44, 1
        %s750 = smul.addr %s749, 4
        %s751 = smul.addr %s750, 4
        %s752 = scalar_lea.vmem %s1, %s751
        %p753 = scmp.lt.s32.totalorder %s44, 1
        %s754 = scalar_select %p753, %s44, 1
        %s755 = smul.addr %s754, 4
        %s756 = smul.addr %s755, 4
        %s757 = scalar_lea.vmem %s3, %s756
        %p758 = scmp.lt.s32.totalorder %s44, 1
        %s759 = scalar_select %p758, %s44, 1
        %s760 = scalar_lea.vmem %s4, %s759
        %p761 = scmp.lt.s32.totalorder %s44, 1
        %s762 = scalar_select %p761, %s44, 1
        %s763 = smul.addr %s762, 4
        %s764 = smul.addr %s763, 4
        %s765 = scalar_lea.vmem %s5, %s764
        %p766 = scmp.lt.s32.totalorder %s44, 1
        %s767 = scalar_select %p766, %s44, 1
        %s768 = scalar_lea.vmem %s6, %s767
        %p769 = scmp.lt.s32.totalorder %s44, 1
        %s770 = scalar_select %p769, %s44, 1
        %s771 = smul.addr %s770, 8
        %s772 = smul.addr %s771, 4
        %s773 = scalar_lea.vmem %s7, %s772
        %p774 = scmp.lt.s32.totalorder %s44, 1
        %s775 = scalar_select %p774, %s44, 1
        %s776 = scalar_lea.vmem %s8, %s775
        %p778 = scmp.eq.s32.totalorder %s44, 0
        // Predicated region
        $region97: #{tpu_custom_call.1} parent=71 // pred_check
          %p779 = pneg %p778
        $region98: #{tpu_custom_call.1} parent=71 // pred_check_branch
          %781 = sbr.rel (%p779) target = $region100
        $region99: #{tpu_custom_call.1} parent=71 // pred_region
          %v782 = vld [vmem:[%s602] sm:$0xff]
          %vm783 = vcmask 261120
          %784 = vst.msk [vmem:[#allocation2] sm:$0xff] %vm783, %v782
        $region100: #{tpu_custom_call.1} parent=71 // pred_fallthru
          _
        %v785 = vld [vmem:[#allocation2] sm:$0xff]
        %v786 = vpack.c.bf16 %v785, %v785
        %v787 = vld [vmem:[%s752] sm:$0xf]
        %v788 = vld [vmem:[%s752 + $0x4] sm:$0xf]
        %v789 = vld [vmem:[%s752 + $0x8] sm:$0xf]
        %v790 = vld [vmem:[%s752 + $0xc] sm:$0xf]
        %v791 = vld [vmem:[%s611] sm:$0x1]
        %v793 = vperm.slane %v791, 0
        %v799 = vunpack.c.l.b16 %v787
        %v800 = vunpack.c.l.b16 %v788
        %v801 = vunpack.c.l.b16 %v789
        %v802 = vunpack.c.l.b16 %v790
        %v803 = vpack.c.b16 %v800, %v799
        %v804 = vpack.c.b16 %v802, %v801
        %vm807 = vcmask 261120
        %v809 = vsel %vm807, %v786, 0
        %811 = vmatpush.bf16.msra.mxu0 0
        %812 = vmatpush.bf16.msra.mxu0 0
        %813 = vmatpush.bf16.msra.mxu0 0
        %814 = vmatpush.bf16.msra.mxu0 0
        %815 = vmatpush.bf16.msra.mxu0 0
        %816 = vmatpush.bf16.msra.mxu0 0
        %817 = vmatpush.bf16.msra.mxu0 %v804
        %818 = vmatpush.bf16.msra.mxu0 %v803
        %819 = vmatmul.bf16.gmra.mxu0 %v809
        %v820 = vpop.f32.mrf.mxu0
        %v821 = vadd.f32 %v793, %v820
        %v822 = vpop.f32.mrf.mxu0
        %823 = vdwg.mxu0
        %v824 = vld [vmem:[%s757] sm:$0xf]
        %v825 = vld [vmem:[%s757 + $0x4] sm:$0xf]
        %v826 = vld [vmem:[%s757 + $0x8] sm:$0xf]
        %v827 = vld [vmem:[%s757 + $0xc] sm:$0xf]
        %v828 = vpack.c.bf16 %v821, %v821
        %830 = vrot.lane.b32.xlu0 %v828, 96
        %v831 = vpop.permute.xlu0 %830
        %vm832 = vcmask 64512
        %v834 = vsel %vm832, %v828, 0
        %v837 = vsel %vm832, %v831, 0
        %839 = vmatpush.bf16.xpose.msra.mxu0 0
        %840 = vmatpush.bf16.xpose.msra.mxu0 0
        %841 = vmatpush.bf16.xpose.msra.mxu0 0
        %842 = vmatpush.bf16.xpose.msra.mxu0 0
        %843 = vmatpush.bf16.xpose.msra.mxu0 0
        %844 = vmatpush.bf16.xpose.msra.mxu0 0
        %845 = vmatpush.bf16.xpose.msra.mxu0 0
        %846 = vmatpush.bf16.xpose.msra.mxu0 %v837
        %847 = vmatmul.bf16.gmra.mxu0 %v834
        %v848 = vpop.f32.mrf.mxu0
        %v849 = vadd.f32 0.0, %v848
        %v850 = vpop.f32.mrf.mxu0
        %851 = vdwg.mxu0
        %v852 = vmul.f32 %v849, 0.35355338
        %v853 = vsel %vm832, %v852, -inf
        %854 = vmax.xlane.f32.xlu0 %v853
        %v855 = vpop.xlane.xlu0 %854
        %v856 = vsub.f32 %v852, %v855
        %v857 = vmul.f32 %v856, 1.442695
        %v858 = vpow.pop %v857
        %v859 = vsel %vm832, %v858, 0.0
        %860 = vadd.xlane.f32.xlu0 %v859
        %v861 = vpop.xlane.xlu0 %860
        %v862 = vrcp.pop %v861
        %v863 = vmul.f32 %v858, %v862
        %v864 = vpack.c.bf16 %v863, %v863
        %865 = vrot.lane.b32.xlu0 %v828, 64
        %v866 = vpop.permute.xlu0 %865
        %v868 = vsel %vm832, %v864, 0
        %vm870 = vcmask 1043456
        %v872 = vsel %vm870, %v866, 0
        %874 = vmatpush.bf16.msra.mxu0 0
        %875 = vmatpush.bf16.msra.mxu0 0
        %876 = vmatpush.bf16.msra.mxu0 0
        %877 = vmatpush.bf16.msra.mxu0 0
        %878 = vmatpush.bf16.msra.mxu0 0
        %879 = vmatpush.bf16.msra.mxu0 0
        %880 = vmatpush.bf16.msra.mxu0 0
        %881 = vmatpush.bf16.msra.mxu0 %v872
        %882 = vmatmul.bf16.gmra.mxu0 %v868
        %v883 = vpop.f32.mrf.mxu0
        %v884 = vadd.f32 0.0, %v883
        %v885 = vpop.f32.mrf.mxu0
        %886 = vdwg.mxu0
        %v887 = vpack.c.bf16 %v884, %v884
        %888 = vrot.lane.b32.xlu0 %v828, 120
        %v889 = vpop.permute.xlu0 %888
        %890 = vrot.lane.b32.xlu0 %v828, 88
        %v891 = vpop.permute.xlu0 %890
        %v893 = vsel %vm832, %v889, 0
        %v896 = vsel %vm832, %v891, 0
        %898 = vmatpush.bf16.xpose.msra.mxu0 0
        %899 = vmatpush.bf16.xpose.msra.mxu0 0
        %900 = vmatpush.bf16.xpose.msra.mxu0 0
        %901 = vmatpush.bf16.xpose.msra.mxu0 0
        %902 = vmatpush.bf16.xpose.msra.mxu0 0
        %903 = vmatpush.bf16.xpose.msra.mxu0 0
        %904 = vmatpush.bf16.xpose.msra.mxu0 0
        %905 = vmatpush.bf16.xpose.msra.mxu0 %v896
        %906 = vmatmul.bf16.gmra.mxu0 %v893
        %v907 = vpop.f32.mrf.mxu0
        %v908 = vadd.f32 0.0, %v907
        %v909 = vpop.f32.mrf.mxu0
        %910 = vdwg.mxu0
        %v911 = vmul.f32 %v908, 0.35355338
        %v912 = vsel %vm832, %v911, -inf
        %913 = vmax.xlane.f32.xlu0 %v912
        %v914 = vpop.xlane.xlu0 %913
        %v915 = vsub.f32 %v911, %v914
        %v916 = vmul.f32 %v915, 1.442695
        %v917 = vpow.pop %v916
        %v918 = vsel %vm832, %v917, 0.0
        %919 = vadd.xlane.f32.xlu0 %v918
        %v920 = vpop.xlane.xlu0 %919
        %v921 = vrcp.pop %v920
        %v922 = vmul.f32 %v917, %v921
        %v923 = vpack.c.bf16 %v922, %v922
        %924 = vrot.lane.b32.xlu0 %v828, 56
        %v925 = vpop.permute.xlu0 %924
        %v927 = vsel %vm832, %v923, 0
        %v930 = vsel %vm870, %v925, 0
        %932 = vmatpush.bf16.msra.mxu0 0
        %933 = vmatpush.bf16.msra.mxu0 0
        %934 = vmatpush.bf16.msra.mxu0 0
        %935 = vmatpush.bf16.msra.mxu0 0
        %936 = vmatpush.bf16.msra.mxu0 0
        %937 = vmatpush.bf16.msra.mxu0 0
        %938 = vmatpush.bf16.msra.mxu0 0
        %939 = vmatpush.bf16.msra.mxu0 %v930
        %940 = vmatmul.bf16.gmra.mxu0 %v927
        %v941 = vpop.f32.mrf.mxu0
        %v942 = vadd.f32 0.0, %v941
        %v943 = vpop.f32.mrf.mxu0
        %944 = vdwg.mxu0
        %v945 = vpack.c.bf16 %v942, %v942
        %v947 = vsel %vm832, %v945, 0
        %v950 = vsel %vm870, %v825, 0
        %952 = vmatpush.bf16.msra.mxu0 0
        %953 = vmatpush.bf16.msra.mxu0 0
        %954 = vmatpush.bf16.msra.mxu0 0
        %955 = vmatpush.bf16.msra.mxu0 0
        %956 = vmatpush.bf16.msra.mxu0 0
        %957 = vmatpush.bf16.msra.mxu0 0
        %958 = vmatpush.bf16.msra.mxu0 0
        %959 = vmatpush.bf16.msra.mxu0 %v950
        %960 = vmatmul.bf16.gmra.mxu0 %v947
        %v961 = vpop.f32.mrf.mxu0
        %v962 = vadd.f32 0.0, %v961
        %v963 = vpop.f32.mrf.mxu0
        %964 = vdwg.mxu0
        %v966 = vsel %vm832, %v887, 0
        %v969 = vsel %vm870, %v824, 0
        %971 = vmatpush.bf16.msra.mxu0 0
        %972 = vmatpush.bf16.msra.mxu0 0
        %973 = vmatpush.bf16.msra.mxu0 0
        %974 = vmatpush.bf16.msra.mxu0 0
        %975 = vmatpush.bf16.msra.mxu0 0
        %976 = vmatpush.bf16.msra.mxu0 0
        %977 = vmatpush.bf16.msra.mxu0 0
        %978 = vmatpush.bf16.msra.mxu0 %v969
        %979 = vmatmul.bf16.gmra.mxu0 %v966
        %v980 = vpop.f32.mrf.mxu0
        %v981 = vadd.f32 %v962, %v980
        %v982 = vpop.f32.mrf.mxu0
        %983 = vdwg.mxu0
        %984 = vrot.lane.b32.xlu0 %v828, 112
        %v985 = vpop.permute.xlu0 %984
        %986 = vrot.lane.b32.xlu0 %v828, 80
        %v987 = vpop.permute.xlu0 %986
        %v989 = vsel %vm832, %v985, 0
        %v992 = vsel %vm832, %v987, 0
        %994 = vmatpush.bf16.xpose.msra.mxu0 0
        %995 = vmatpush.bf16.xpose.msra.mxu0 0
        %996 = vmatpush.bf16.xpose.msra.mxu0 0
        %997 = vmatpush.bf16.xpose.msra.mxu0 0
        %998 = vmatpush.bf16.xpose.msra.mxu0 0
        %999 = vmatpush.bf16.xpose.msra.mxu0 0
        %1000 = vmatpush.bf16.xpose.msra.mxu0 0
        %1001 = vmatpush.bf16.xpose.msra.mxu0 %v992
        %1002 = vmatmul.bf16.gmra.mxu0 %v989
        %v1003 = vpop.f32.mrf.mxu0
        %v1004 = vadd.f32 0.0, %v1003
        %v1005 = vpop.f32.mrf.mxu0
        %1006 = vdwg.mxu0
        %v1007 = vmul.f32 %v1004, 0.35355338
        %v1008 = vsel %vm832, %v1007, -inf
        %1009 = vmax.xlane.f32.xlu0 %v1008
        %v1010 = vpop.xlane.xlu0 %1009
        %v1011 = vsub.f32 %v1007, %v1010
        %v1012 = vmul.f32 %v1011, 1.442695
        %v1013 = vpow.pop %v1012
        %v1014 = vsel %vm832, %v1013, 0.0
        %1015 = vadd.xlane.f32.xlu0 %v1014
        %v1016 = vpop.xlane.xlu0 %1015
        %v1017 = vrcp.pop %v1016
        %v1018 = vmul.f32 %v1013, %v1017
        %v1019 = vpack.c.bf16 %v1018, %v1018
        %1020 = vrot.lane.b32.xlu0 %v828, 48
        %v1021 = vpop.permute.xlu0 %1020
        %v1023 = vsel %vm832, %v1019, 0
        %v1026 = vsel %vm870, %v1021, 0
        %1028 = vmatpush.bf16.msra.mxu0 0
        %1029 = vmatpush.bf16.msra.mxu0 0
        %1030 = vmatpush.bf16.msra.mxu0 0
        %1031 = vmatpush.bf16.msra.mxu0 0
        %1032 = vmatpush.bf16.msra.mxu0 0
        %1033 = vmatpush.bf16.msra.mxu0 0
        %1034 = vmatpush.bf16.msra.mxu0 0
        %1035 = vmatpush.bf16.msra.mxu0 %v1026
        %1036 = vmatmul.bf16.gmra.mxu0 %v1023
        %v1037 = vpop.f32.mrf.mxu0
        %v1038 = vadd.f32 0.0, %v1037
        %v1039 = vpop.f32.mrf.mxu0
        %1040 = vdwg.mxu0
        %v1041 = vpack.c.bf16 %v1038, %v1038
        %v1043 = vsel %vm832, %v1041, 0
        %v1046 = vsel %vm870, %v826, 0
        %1048 = vmatpush.bf16.msra.mxu0 0
        %1049 = vmatpush.bf16.msra.mxu0 0
        %1050 = vmatpush.bf16.msra.mxu0 0
        %1051 = vmatpush.bf16.msra.mxu0 0
        %1052 = vmatpush.bf16.msra.mxu0 0
        %1053 = vmatpush.bf16.msra.mxu0 0
        %1054 = vmatpush.bf16.msra.mxu0 0
        %1055 = vmatpush.bf16.msra.mxu0 %v1046
        %1056 = vmatmul.bf16.gmra.mxu0 %v1043
        %v1057 = vpop.f32.mrf.mxu0
        %v1058 = vadd.f32 0.0, %v1057
        %v1059 = vpop.f32.mrf.mxu0
        %1060 = vdwg.mxu0
        %v1061 = vadd.f32 %v981, %v1058
        %1062 = vrot.lane.b32.xlu0 %v828, 104
        %v1063 = vpop.permute.xlu0 %1062
        %1064 = vrot.lane.b32.xlu0 %v828, 72
        %v1065 = vpop.permute.xlu0 %1064
        %v1067 = vsel %vm832, %v1063, 0
        %v1070 = vsel %vm832, %v1065, 0
        %1072 = vmatpush.bf16.xpose.msra.mxu0 0
        %1073 = vmatpush.bf16.xpose.msra.mxu0 0
        %1074 = vmatpush.bf16.xpose.msra.mxu0 0
        %1075 = vmatpush.bf16.xpose.msra.mxu0 0
        %1076 = vmatpush.bf16.xpose.msra.mxu0 0
        %1077 = vmatpush.bf16.xpose.msra.mxu0 0
        %1078 = vmatpush.bf16.xpose.msra.mxu0 0
        %1079 = vmatpush.bf16.xpose.msra.mxu0 %v1070
        %1080 = vmatmul.bf16.gmra.mxu0 %v1067
        %v1081 = vpop.f32.mrf.mxu0
        %v1082 = vadd.f32 0.0, %v1081
        %v1083 = vpop.f32.mrf.mxu0
        %1084 = vdwg.mxu0
        %v1085 = vmul.f32 %v1082, 0.35355338
        %v1086 = vsel %vm832, %v1085, -inf
        %1087 = vmax.xlane.f32.xlu0 %v1086
        %v1088 = vpop.xlane.xlu0 %1087
        %v1089 = vsub.f32 %v1085, %v1088
        %v1090 = vmul.f32 %v1089, 1.442695
        %v1091 = vpow.pop %v1090
        %v1092 = vsel %vm832, %v1091, 0.0
        %1093 = vadd.xlane.f32.xlu0 %v1092
        %v1094 = vpop.xlane.xlu0 %1093
        %v1095 = vrcp.pop %v1094
        %v1096 = vmul.f32 %v1091, %v1095
        %v1097 = vpack.c.bf16 %v1096, %v1096
        %1098 = vrot.lane.b32.xlu0 %v828, 40
        %v1099 = vpop.permute.xlu0 %1098
        %v1101 = vsel %vm832, %v1097, 0
        %v1104 = vsel %vm870, %v1099, 0
        %1106 = vmatpush.bf16.msra.mxu0 0
        %1107 = vmatpush.bf16.msra.mxu0 0
        %1108 = vmatpush.bf16.msra.mxu0 0
        %1109 = vmatpush.bf16.msra.mxu0 0
        %1110 = vmatpush.bf16.msra.mxu0 0
        %1111 = vmatpush.bf16.msra.mxu0 0
        %1112 = vmatpush.bf16.msra.mxu0 0
        %1113 = vmatpush.bf16.msra.mxu0 %v1104
        %1114 = vmatmul.bf16.gmra.mxu0 %v1101
        %v1115 = vpop.f32.mrf.mxu0
        %v1116 = vadd.f32 0.0, %v1115
        %v1117 = vpop.f32.mrf.mxu0
        %1118 = vdwg.mxu0
        %v1119 = vpack.c.bf16 %v1116, %v1116
        %v1121 = vsel %vm832, %v1119, 0
        %v1124 = vsel %vm870, %v827, 0
        %1126 = vmatpush.bf16.msra.mxu0 0
        %1127 = vmatpush.bf16.msra.mxu0 0
        %1128 = vmatpush.bf16.msra.mxu0 0
        %1129 = vmatpush.bf16.msra.mxu0 0
        %1130 = vmatpush.bf16.msra.mxu0 0
        %1131 = vmatpush.bf16.msra.mxu0 0
        %1132 = vmatpush.bf16.msra.mxu0 0
        %1133 = vmatpush.bf16.msra.mxu0 %v1124
        %1134 = vmatmul.bf16.gmra.mxu0 %v1121
        %v1135 = vpop.f32.mrf.mxu0
        %v1136 = vadd.f32 0.0, %v1135
        %v1137 = vpop.f32.mrf.mxu0
        %1138 = vdwg.mxu0
        %v1139 = vadd.f32 %v1061, %v1136
        %v1140 = vld [vmem:[%s760] sm:$0x1]
        %v1142 = vperm.slane %v1140, 0
        %v1144 = vadd.f32 %v1139, %v1142
        %v1145 = vadd.f32 %v785, %v1144
        %v1146 = vsel %vm807, %v1145, 0.0
        %1147 = vadd.xlane.f32.xlu0 %v1146
        %v1148 = vpop.xlane.xlu0 %1147
        %v1149 = vrot.slane %v1148, 4
        %v1150 = vadd.f32 %v1148, %v1149
        %v1151 = vrot.slane %v1150, 2
        %v1152 = vadd.f32 %v1150, %v1151
        %v1153 = vrot.slane %v1152, 1
        %v1154 = vadd.f32 %v1152, %v1153
        %s1155 = vtos %v1154
        %v1156 = vstv %s1155
        %v1157 = vrcp.pop 256.0
        %v1158 = vmul.f32 256.0, %v1157
        %v1159 = vsub.f32 1.0, %v1158
        %v1160 = vmul.f32 %v1157, %v1159
        %v1161 = vadd.f32 %v1157, %v1160
        %vm1162 = vweird.f32 %v1157
        %v1163 = vsel %vm1162, %v1157, %v1161
        %v1164 = vmul.f32 %v1156, %v1163
        %v1165 = vsub.f32 %v1145, %v1164
        %v1166 = vmul.f32 %v1165, %v1165
        %v1167 = vsel %vm807, %v1166, 0.0
        %1168 = vadd.xlane.f32.xlu0 %v1167
        %v1169 = vpop.xlane.xlu0 %1168
        %v1170 = vrot.slane %v1169, 4
        %v1171 = vadd.f32 %v1169, %v1170
        %v1172 = vrot.slane %v1171, 2
        %v1173 = vadd.f32 %v1171, %v1172
        %v1174 = vrot.slane %v1173, 1
        %v1175 = vadd.f32 %v1173, %v1174
        %s1176 = vtos %v1175
        %v1177 = vstv %s1176
        %v1178 = vmul.f32 %v1177, %v1163
        %v1179 = vadd.f32 %v1178, 1e-06
        %v1180 = vrsqrt.pop %v1179
        %v1181 = vmul.f32 %v1180, %v1179
        %v1182 = vmul.f32 %v1181, %v1180
        %v1183 = vmul.f32 0.5, %v1182
        %v1184 = vsub.f32 1.5, %v1183
        %v1185 = vmul.f32 %v1180, %v1184
        %vm1186 = vweird.f32 %v1179
        %vm1187 = vweird.f32 %v1180
        %vm1188 = vmor %vm1186, %vm1187
        %v1189 = vsel %vm1188, %v1180, %v1185
        %v1190 = vmul.f32 %v1165, %v1189
        %v1191 = vld [vmem:[%s621] sm:$0xff]
        %v1192 = vmul.f32 %v1190, %v1191
        %v1193 = vld [vmem:[%s631] sm:$0xff]
        %v1194 = vadd.f32 %v1192, %v1193
        %v1195 = vpack.c.bf16 %v1194, %v1194
        %v1196 = vld [vmem:[%s765] sm:$0xf]
        %v1197 = vld [vmem:[%s765 + $0x4] sm:$0xf]
        %v1198 = vld [vmem:[%s765 + $0x8] sm:$0xf]
        %v1199 = vld [vmem:[%s765 + $0xc] sm:$0xf]
        %v1200 = vld [vmem:[%s768] sm:$0x1]
        %v1202 = vperm.slane %v1200, 0
        %v1208 = vunpack.c.l.b16 %v1196
        %v1209 = vunpack.c.l.b16 %v1197
        %v1210 = vunpack.c.l.b16 %v1198
        %v1211 = vunpack.c.l.b16 %v1199
        %v1212 = vpack.c.b16 %v1209, %v1208
        %v1213 = vpack.c.b16 %v1211, %v1210
        %v1217 = vsel %vm807, %v1195, 0
        %1219 = vmatpush.bf16.msra.mxu0 0
        %1220 = vmatpush.bf16.msra.mxu0 0
        %1221 = vmatpush.bf16.msra.mxu0 0
        %1222 = vmatpush.bf16.msra.mxu0 0
        %1223 = vmatpush.bf16.msra.mxu0 0
        %1224 = vmatpush.bf16.msra.mxu0 0
        %1225 = vmatpush.bf16.msra.mxu0 %v1213
        %1226 = vmatpush.bf16.msra.mxu0 %v1212
        %1227 = vmatmul.bf16.gmra.mxu0 %v1217
        %v1228 = vpop.f32.mrf.mxu0
        %v1229 = vadd.f32 %v1202, %v1228
        %v1230 = vpop.f32.mrf.mxu0
        %1231 = vdwg.mxu0
        %v1232 = vmax.f32 %v1229, 0.0
        %v1233 = vpack.c.bf16 %v1232, %v1232
        %v1234 = vld [vmem:[%s773] sm:$0xf]
        %v1235 = vld [vmem:[%s773 + $0x4] sm:$0xf]
        %v1236 = vld [vmem:[%s773 + $0x8] sm:$0xf]
        %v1237 = vld [vmem:[%s773 + $0xc] sm:$0xf]
        %v1238 = vld [vmem:[%s773 + $0x10] sm:$0xf]
        %v1239 = vld [vmem:[%s773 + $0x14] sm:$0xf]
        %v1240 = vld [vmem:[%s773 + $0x18] sm:$0xf]
        %v1241 = vld [vmem:[%s773 + $0x1c] sm:$0xf]
        %v1242 = vld [vmem:[%s776] sm:$0x1]
        %v1244 = vperm.slane %v1242, 0
        %v1254 = vunpack.c.l.b16 %v1234
        %v1255 = vunpack.c.l.b16 %v1235
        %v1256 = vunpack.c.l.b16 %v1236
        %v1257 = vunpack.c.l.b16 %v1237
        %v1258 = vunpack.c.l.b16 %v1238
        %v1259 = vunpack.c.l.b16 %v1239
        %v1260 = vunpack.c.l.b16 %v1240
        %v1261 = vunpack.c.l.b16 %v1241
        %v1262 = vpack.c.b16 %v1255, %v1254
        %v1263 = vpack.c.b16 %v1257, %v1256
        %v1264 = vpack.c.b16 %v1259, %v1258
        %v1265 = vpack.c.b16 %v1261, %v1260
        %vm1270 = vcmask 523264
        %v1272 = vsel %vm1270, %v1233, 0
        %1274 = vmatpush.bf16.msra.mxu0 0
        %1275 = vmatpush.bf16.msra.mxu0 0
        %1276 = vmatpush.bf16.msra.mxu0 0
        %1277 = vmatpush.bf16.msra.mxu0 0
        %1278 = vmatpush.bf16.msra.mxu0 %v1265
        %1279 = vmatpush.bf16.msra.mxu0 %v1264
        %1280 = vmatpush.bf16.msra.mxu0 %v1263
        %1281 = vmatpush.bf16.msra.mxu0 %v1262
        %1282 = vmatmul.bf16.gmra.mxu0 %v1272
        %v1283 = vpop.f32.mrf.mxu0
        %v1284 = vadd.f32 %v1244, %v1283
        %v1285 = vpop.f32.mrf.mxu0
        %1286 = vdwg.mxu0
        %v1287 = vadd.f32 %v1194, %v1284
        %v1288 = vsel %vm807, %v1287, 0.0
        %1289 = vadd.xlane.f32.xlu0 %v1288
        %v1290 = vpop.xlane.xlu0 %1289
        %v1291 = vrot.slane %v1290, 4
        %v1292 = vadd.f32 %v1290, %v1291
        %v1293 = vrot.slane %v1292, 2
        %v1294 = vadd.f32 %v1292, %v1293
        %v1295 = vrot.slane %v1294, 1
        %v1296 = vadd.f32 %v1294, %v1295
        %s1297 = vtos %v1296
        %v1298 = vstv %s1297
        %v1299 = vmul.f32 %v1298, %v1163
        %v1300 = vsub.f32 %v1287, %v1299
        %v1301 = vmul.f32 %v1300, %v1300
        %v1302 = vsel %vm807, %v1301, 0.0
        %1303 = vadd.xlane.f32.xlu0 %v1302
        %v1304 = vpop.xlane.xlu0 %1303
        %v1305 = vrot.slane %v1304, 4
        %v1306 = vadd.f32 %v1304, %v1305
        %v1307 = vrot.slane %v1306, 2
        %v1308 = vadd.f32 %v1306, %v1307
        %v1309 = vrot.slane %v1308, 1
        %v1310 = vadd.f32 %v1308, %v1309
        %s1311 = vtos %v1310
        %v1312 = vstv %s1311
        %v1313 = vmul.f32 %v1312, %v1163
        %v1314 = vadd.f32 %v1313, 1e-06
        %v1315 = vrsqrt.pop %v1314
        %v1316 = vmul.f32 %v1315, %v1314
        %v1317 = vmul.f32 %v1316, %v1315
        %v1318 = vmul.f32 0.5, %v1317
        %v1319 = vsub.f32 1.5, %v1318
        %v1320 = vmul.f32 %v1315, %v1319
        %vm1321 = vweird.f32 %v1314
        %vm1322 = vweird.f32 %v1315
        %vm1323 = vmor %vm1321, %vm1322
        %v1324 = vsel %vm1323, %v1315, %v1320
        %v1325 = vmul.f32 %v1300, %v1324
        %v1326 = vld [vmem:[%s641] sm:$0xff]
        %v1327 = vmul.f32 %v1325, %v1326
        %v1328 = vld [vmem:[%s651] sm:$0xff]
        %v1329 = vadd.f32 %v1327, %v1328
        %1330 = vst.msk [vmem:[#allocation2] sm:$0xff] %vm807, %v1329
        %p1331 = scmp.eq.s32.totalorder %s44, 1
        // Predicated region
        $region101: #{tpu_custom_call.1} parent=71 // pred_check
          %p1332 = pneg %p1331
        $region102: #{tpu_custom_call.1} parent=71 // pred_check_branch
          %1334 = sbr.rel (%p1332) target = $region104
        $region103: #{tpu_custom_call.1} parent=71 // pred_region
          %1335 = vst.msk [vmem:[%s747] sm:$0xff] %vm807, %v1329
        $region104: #{tpu_custom_call.1} parent=71 // pred_fallthru
          _
        %s1336 = sand.u32 %s397, 1
        %s1337 = scalar_lea.sflag [#allocation5], %s1336
        %s1338 = sand.u32 %s397, 1
        %s1339 = smul.addr %s1338, 8
        %s1340 = scalar_lea.vmem [#allocation14], %s1339
        // Predicated region
        $region105: #{tpu_custom_call.1} parent=71 // pred_check
          %p1341 = pneg %p407
        $region106: #{tpu_custom_call.1} parent=71 // pred_check_branch
          %1343 = sbr.rel (%p1341) target = $region108
        $region107: #{tpu_custom_call.1} parent=71 // pred_region
          %1345 = vsyncadd %s1337, 0
          %s1346 = smul.addr %s43, 8
          %s1347 = scalar_lea.hbm %s13, %s1346
          %s1349 = sshll.u32 %s1340, 4
          %s1350 = int_to_ptr.vmem [resolvable:$true] %s1349
          %s1351 = sshll.u32 %s1347, 4
          %s1352 = int_to_ptr.hbm [resolvable:$true] %s1351
          %1354 = dma.vmem_to_hbm [thread:$0]  %s1350, 128, %s1352, %s1337
        $region108: #{tpu_custom_call.1} parent=71 // pred_fallthru
          _
      $region72: #{tpu_custom_call.1} parent=5 // pred_fallthru
        _
      %p1355 = scmp.le.s32.totalorder 2, %s34
      // Predicated region
      $region109: #{tpu_custom_call.1} parent=5 // pred_check
        %p1356 = pneg %p1355
      $region110: #{tpu_custom_call.1} parent=5 // pred_check_branch
        %1358 = sbr.rel (%p1356) target = $region112
      $region111: #{tpu_custom_call.1} parent=5 // pred_region
        %s1359 = ssub.s32 %s34, 2
        // Predicated region
        $region113: #{tpu_custom_call.1} parent=111 // pred_check
          %p1360 = pneg %p413
        $region114: #{tpu_custom_call.1} parent=111 // pred_check_branch
          %1362 = sbr.rel (%p1360) target = $region116
        $region115: #{tpu_custom_call.1} parent=111 // pred_region
          %s1363 = sand.u32 %s398, 1
          %s1364 = scalar_lea.sflag [#allocation5], %s1363
          %s1365 = sand.u32 %s398, 1
          %s1366 = smul.addr %s1365, 8
          %s1367 = scalar_lea.vmem [#allocation14], %s1366
          %1369 = dma.done %s1364, 128
        $region116: #{tpu_custom_call.1} parent=111 // pred_fallthru
          _
      $region112: #{tpu_custom_call.1} parent=5 // pred_fallthru
        _
    $region6: #{tpu_custom_call.1} parent=1 // loop_footer
      %s38 = sadd.s32 1, %s34
    $region7: #{tpu_custom_call.1} parent=1 // loop_footer_branch
      %33 = sbr.rel target = $region3
    $region8: #{tpu_custom_call.1} parent=1 // loop_exit
      _
    %1370 = vsyncpa [#allocation4], 1
    %s1371 = scalar_lea.sflag [#allocation4], 1
    %1372 = vsyncpa %s1371, 1
    %1373 = vsyncpa [#allocation7], 1
    %s1374 = scalar_lea.sflag [#allocation7], 1
    %1375 = vsyncpa %s1374, 1
    %1376 = vsyncpa [#allocation10], 1
    %s1377 = scalar_lea.sflag [#allocation10], 1
    %1378 = vsyncpa %s1377, 1
    %1379 = vsyncpa [#allocation13], 1
    %s1380 = scalar_lea.sflag [#allocation13], 1
    %1381 = vsyncpa %s1380, 1
    %1382 = vsyncpa [#allocation5], 1
    %s1383 = scalar_lea.sflag [#allocation5], 1
    %1384 = vsyncpa %s1383, 1

</llo_original>
